<compile_context>
chip_gen: v6e
topology: v6e:2x2x1
jax: 0.10.0
libtpu: 0.0.40
codegen_flags: <defaults>
</compile_context>

<pallas_src>
import functools

import jax
import jax.numpy as jnp
from jax.experimental import pallas as pl
from jax.experimental.pallas import tpu as pltpu

_ROW_TILE = 32   # output rows computed per grid step (statically unrolled)


def _fool_conv_kernel(x_ref, w_ref, b_ref, o_ref, *, th, ho, kh, kw, cin, wo):
    # x_ref: (1, Cin, H, W)     full image of the current sample (VMEM resident)
    # w_ref: (Cout, K)          conv weight, K = KW*Cin*KH, pinned in VMEM
    # b_ref: (Cout, 1)          bias with the learnable scalar p folded in
    # o_ref: (1, th, Cout, Wo)  output rows of the current (sample, row-tile)
    r = pl.program_id(1)
    w2 = w_ref[...]
    b2 = b_ref[...]
    row0 = r * th
    for t in range(th):                          # static unroll (th <= _ROW_TILE)
        # Clamp so a partial last row-tile never reads OOB; the extra rows it
        # produces land past Ho in the block and are masked by the writeback.
        h = jnp.minimum(row0 + t, ho - 1)
        rows = x_ref[0, :, pl.ds(h, kh), :]      # (Cin, KH, W)
        # patches^T (K, Wo), k = j*(Cin*KH) + ci*KH + i  -- matches w2 layout.
        parts = [rows[ci, :, j:j + wo] for j in range(kw) for ci in range(cin)]
        pt = jnp.concatenate(parts, axis=0)      # (K, Wo)
        out_row = jnp.dot(w2, pt, preferred_element_type=jnp.float32) + b2
        o_ref[0, t, :, :] = out_row.astype(o_ref.dtype)


@jax.jit
def fool_conv_module(x_nchw, p_scalar, weight, bias):
    """x_nchw: [N, 3, H, W] f32. weight: [32, 3, 3, 3] (OIHW). bias: [32].
    p_scalar: scalar f32. Returns [N, 32, H-2, W-2] f32 == Conv2d(3,32,3)(x + p)."""
    N, Cin, H, W = x_nchw.shape
    Cout, _, KH, KW = weight.shape
    Ho, Wo = H - KH + 1, W - KW + 1
    K = KW * Cin * KH

    x = x_nchw.astype(jnp.float32)

    # weight (Cout, Cin, KH, KW) -> (Cout, K) with k = j*(Cin*KH) + ci*KH + i,
    # matching the in-kernel patch assembly order.
    w2 = jnp.transpose(weight, (0, 3, 1, 2)).reshape(Cout, K).astype(jnp.float32)

    # Fold the learnable scalar p into the bias:
    # (x + p) @ W + b = x @ W + (b + p * rowsum(W)).
    p = jnp.asarray(p_scalar, jnp.float32)
    b2 = (bias.astype(jnp.float32) + p * jnp.sum(w2, axis=1)).reshape(Cout, 1)

    # Row tiling: th output rows per grid step.  For N == 1 split the rows so
    # the grid still has >= 2 steps (both v7x TensorCores get work).
    th = min(_ROW_TILE, Ho)
    if N == 1 and Ho >= 2:
        th = min(th, -(-Ho // 2))
    nr = -(-Ho // th)

    out_nhcw = pl.pallas_call(
        functools.partial(_fool_conv_kernel,
                          th=th, ho=Ho, kh=KH, kw=KW, cin=Cin, wo=Wo),
        out_shape=jax.ShapeDtypeStruct((N, Ho, Cout, Wo), jnp.float32),
        grid=(N, nr),
        in_specs=[
            pl.BlockSpec((1, Cin, H, W), lambda n, r: (n, 0, 0, 0)),  # image (resident across r)
            pl.BlockSpec((Cout, K), lambda n, r: (0, 0)),             # weight (pinned)
            pl.BlockSpec((Cout, 1), lambda n, r: (0, 0)),             # bias   (pinned)
        ],
        out_specs=pl.BlockSpec((1, th, Cout, Wo), lambda n, r: (n, r, 0, 0)),
        compiler_params=pltpu.CompilerParams(
            dimension_semantics=("parallel", "parallel"),
            vmem_limit_bytes=32 * 1024 * 1024),
        cost_estimate=pl.CostEstimate(
            flops=2 * N * Ho * Wo * Cout * K,
            bytes_accessed=4 * (N * Cin * H * W + Cout * K + Cout
                                + N * Ho * Cout * Wo),
            transcendentals=0),
    )(x, w2, b2)

    # Single relayout back to NCHW (kept wrapper-side so every in-kernel store
    # is a full lane-dense (Cout, Wo) tile instead of a sublane scatter).
    return jnp.transpose(out_nhcw, (0, 2, 1, 3))


if __name__ == "__main__":
    key = jax.random.PRNGKey(0)
    kx, kwt, kb = jax.random.split(key, 3)

    # Small shapes consistent with the module: Conv2d(3, 32, 3) forces Cin=3.
    N, Cin, H, W = 2, 3, 16, 16
    Cout, KH, KW = 32, 3, 3

    x = jax.random.normal(kx, (N, Cin, H, W), dtype=jnp.float32)
    # Deterministic parameter init (synthetic; roughly Conv2d-scale uniform).
    fan_in = Cin * KH * KW
    bound = 1.0 / (fan_in ** 0.5)
    weight = jax.random.uniform(kwt, (Cout, Cin, KH, KW), jnp.float32, -bound, bound)
    bias = jax.random.uniform(kb, (Cout,), jnp.float32, -bound, bound)
    p = jnp.float32(0.1)

    out = fool_conv_module(x, p, weight, bias)
    out = jax.block_until_ready(out)
    assert out.shape == (N, Cout, H - 2, W - 2), out.shape

    # Reference check with lax.conv on (x + p).
    ref = jax.lax.conv_general_dilated(
        x + p, weight, window_strides=(1, 1), padding="VALID",
        dimension_numbers=("NCHW", "OIHW", "NCHW"),
    ) + bias.reshape(1, Cout, 1, 1)
    assert jnp.allclose(out, ref, atol=1e-4, rtol=1e-4), float(jnp.max(jnp.abs(out - ref)))

    print("KERNEL_OK")
</pallas_src>

<mosaic_0001>
module attributes {stable_mosaic.version = 11 : i64} {
  func.func @_fool_conv_kernel(%arg0: i32, %arg1: i32, %arg2: memref<1x3x16x16xf32, #tpu.memory_space<vmem>>, %arg3: memref<32x27xf32, #tpu.memory_space<vmem>>, %arg4: memref<32x1xf32, #tpu.memory_space<vmem>>, %arg5: memref<1x14x32x14xf32, #tpu.memory_space<vmem>>) attributes {dimension_semantics = [#tpu.dimension_semantics<parallel>, #tpu.dimension_semantics<parallel>], iteration_bounds = array<i64: 2, 1>, scalar_prefetch = 0 : i64, scratch_operands = 0 : i64, tpu.core_type = #tpu.core_type<tc>, window_params = [{transform_indices = @transform_0, window_bounds = array<i64: 1, 3, 16, 16>}, {pipeline_mode = #tpu.pipeline_mode<synchronous>, transform_indices = @transform_1, window_bounds = array<i64: 32, 27>}, {pipeline_mode = #tpu.pipeline_mode<synchronous>, transform_indices = @transform_2, window_bounds = array<i64: 32, 1>}, {transform_indices = @transform_3, window_bounds = array<i64: 1, 14, 32, 14>}]} {
    %c0 = arith.constant 0 : index
    %c0_0 = arith.constant 0 : index
    %0 = vector.load %arg3[%c0, %c0_0] : memref<32x27xf32, #tpu.memory_space<vmem>>, vector<32x27xf32>
    %c0_1 = arith.constant 0 : index
    %c0_2 = arith.constant 0 : index
    %1 = vector.load %arg4[%c0_1, %c0_2] : memref<32x1xf32, #tpu.memory_space<vmem>>, vector<32x1xf32>
    %c14_i32 = arith.constant 14 : i32
    %2 = arith.muli %arg1, %c14_i32 : i32
    %c0_i32 = arith.constant 0 : i32
    %3 = arith.addi %2, %c0_i32 : i32
    %c13_i32 = arith.constant 13 : i32
    %4 = arith.minsi %3, %c13_i32 : i32
    %c0_3 = arith.constant 0 : index
    %c0_4 = arith.constant 0 : index
    %5 = arith.index_cast %4 : i32 to index
    %c0_5 = arith.constant 0 : index
    %6 = vector.load %arg2[%c0_3, %c0_4, %5, %c0_5] : memref<1x3x16x16xf32, #tpu.memory_space<vmem>>, vector<1x3x3x16xf32>
    %7 = vector.shape_cast %6 : vector<1x3x3x16xf32> to vector<3x3x16xf32>
    %8 = vector.extract_strided_slice %7 {offsets = [0, 0, 0], sizes = [1, 3, 14], strides = [1, 1, 1]} : vector<3x3x16xf32> to vector<1x3x14xf32>
    %9 = vector.shape_cast %8 : vector<1x3x14xf32> to vector<3x14xf32>
    %10 = vector.extract_strided_slice %7 {offsets = [1, 0, 0], sizes = [1, 3, 14], strides = [1, 1, 1]} : vector<3x3x16xf32> to vector<1x3x14xf32>
    %11 = vector.shape_cast %10 : vector<1x3x14xf32> to vector<3x14xf32>
    %12 = vector.extract_strided_slice %7 {offsets = [2, 0, 0], sizes = [1, 3, 14], strides = [1, 1, 1]} : vector<3x3x16xf32> to vector<1x3x14xf32>
    %13 = vector.shape_cast %12 : vector<1x3x14xf32> to vector<3x14xf32>
    %14 = vector.extract_strided_slice %7 {offsets = [0, 0, 1], sizes = [1, 3, 14], strides = [1, 1, 1]} : vector<3x3x16xf32> to vector<1x3x14xf32>
    %15 = vector.shape_cast %14 : vector<1x3x14xf32> to vector<3x14xf32>
    %16 = vector.extract_strided_slice %7 {offsets = [1, 0, 1], sizes = [1, 3, 14], strides = [1, 1, 1]} : vector<3x3x16xf32> to vector<1x3x14xf32>
    %17 = vector.shape_cast %16 : vector<1x3x14xf32> to vector<3x14xf32>
    %18 = vector.extract_strided_slice %7 {offsets = [2, 0, 1], sizes = [1, 3, 14], strides = [1, 1, 1]} : vector<3x3x16xf32> to vector<1x3x14xf32>
    %19 = vector.shape_cast %18 : vector<1x3x14xf32> to vector<3x14xf32>
    %20 = vector.extract_strided_slice %7 {offsets = [0, 0, 2], sizes = [1, 3, 14], strides = [1, 1, 1]} : vector<3x3x16xf32> to vector<1x3x14xf32>
    %21 = vector.shape_cast %20 : vector<1x3x14xf32> to vector<3x14xf32>
    %22 = vector.extract_strided_slice %7 {offsets = [1, 0, 2], sizes = [1, 3, 14], strides = [1, 1, 1]} : vector<3x3x16xf32> to vector<1x3x14xf32>
    %23 = vector.shape_cast %22 : vector<1x3x14xf32> to vector<3x14xf32>
    %24 = vector.extract_strided_slice %7 {offsets = [2, 0, 2], sizes = [1, 3, 14], strides = [1, 1, 1]} : vector<3x3x16xf32> to vector<1x3x14xf32>
    %25 = vector.shape_cast %24 : vector<1x3x14xf32> to vector<3x14xf32>
    %26 = tpu.concatenate %9, %11, %13, %15, %17, %19, %21, %23, %25 in 0 : vector<3x14xf32>, vector<3x14xf32>, vector<3x14xf32>, vector<3x14xf32>, vector<3x14xf32>, vector<3x14xf32>, vector<3x14xf32>, vector<3x14xf32>, vector<3x14xf32> -> vector<27x14xf32>
    %cst = arith.constant dense<0.000000e+00> : vector<32x14xf32>
    %27 = tpu.matmul %0, %26, %cst {dimension_numbers = #tpu.dot_dimension_numbers<[1], [0], [0], [1], [0, 0, 1, 1], [], []>} : vector<32x27xf32>, vector<27x14xf32>, vector<32x14xf32> -> vector<32x14xf32>
    %28 = vector.broadcast %1 : vector<32x1xf32> to vector<32x14xf32>
    %29 = arith.addf %27, %28 : vector<32x14xf32>
    %c0_6 = arith.constant 0 : index
    %c0_7 = arith.constant 0 : index
    %c0_8 = arith.constant 0 : index
    %c0_9 = arith.constant 0 : index
    %30 = vector.load %arg5[%c0_6, %c0_7, %c0_8, %c0_9] : memref<1x14x32x14xf32, #tpu.memory_space<vmem>>, vector<1x1x32x14xf32>
    %31 = vector.shape_cast %30 : vector<1x1x32x14xf32> to vector<32x14xf32>
    %32 = vector.shape_cast %29 : vector<32x14xf32> to vector<1x1x32x14xf32>
    tpu.vector_store %arg5[%c0_6, %c0_7, %c0_8, %c0_9], %32 {strides = array<i32>} : memref<1x14x32x14xf32, #tpu.memory_space<vmem>>, vector<1x1x32x14xf32>,
    %c1_i32 = arith.constant 1 : i32
    %33 = arith.addi %2, %c1_i32 : i32
    %c13_i32_10 = arith.constant 13 : i32
    %34 = arith.minsi %33, %c13_i32_10 : i32
    %c0_11 = arith.constant 0 : index
    %c0_12 = arith.constant 0 : index
    %35 = arith.index_cast %34 : i32 to index
    %c0_13 = arith.constant 0 : index
    %36 = vector.load %arg2[%c0_11, %c0_12, %35, %c0_13] : memref<1x3x16x16xf32, #tpu.memory_space<vmem>>, vector<1x3x3x16xf32>
    %37 = vector.shape_cast %36 : vector<1x3x3x16xf32> to vector<3x3x16xf32>
    %38 = vector.extract_strided_slice %37 {offsets = [0, 0, 0], sizes = [1, 3, 14], strides = [1, 1, 1]} : vector<3x3x16xf32> to vector<1x3x14xf32>
    %39 = vector.shape_cast %38 : vector<1x3x14xf32> to vector<3x14xf32>
    %40 = vector.extract_strided_slice %37 {offsets = [1, 0, 0], sizes = [1, 3, 14], strides = [1, 1, 1]} : vector<3x3x16xf32> to vector<1x3x14xf32>
    %41 = vector.shape_cast %40 : vector<1x3x14xf32> to vector<3x14xf32>
    %42 = vector.extract_strided_slice %37 {offsets = [2, 0, 0], sizes = [1, 3, 14], strides = [1, 1, 1]} : vector<3x3x16xf32> to vector<1x3x14xf32>
    %43 = vector.shape_cast %42 : vector<1x3x14xf32> to vector<3x14xf32>
    %44 = vector.extract_strided_slice %37 {offsets = [0, 0, 1], sizes = [1, 3, 14], strides = [1, 1, 1]} : vector<3x3x16xf32> to vector<1x3x14xf32>
    %45 = vector.shape_cast %44 : vector<1x3x14xf32> to vector<3x14xf32>
    %46 = vector.extract_strided_slice %37 {offsets = [1, 0, 1], sizes = [1, 3, 14], strides = [1, 1, 1]} : vector<3x3x16xf32> to vector<1x3x14xf32>
    %47 = vector.shape_cast %46 : vector<1x3x14xf32> to vector<3x14xf32>
    %48 = vector.extract_strided_slice %37 {offsets = [2, 0, 1], sizes = [1, 3, 14], strides = [1, 1, 1]} : vector<3x3x16xf32> to vector<1x3x14xf32>
    %49 = vector.shape_cast %48 : vector<1x3x14xf32> to vector<3x14xf32>
    %50 = vector.extract_strided_slice %37 {offsets = [0, 0, 2], sizes = [1, 3, 14], strides = [1, 1, 1]} : vector<3x3x16xf32> to vector<1x3x14xf32>
    %51 = vector.shape_cast %50 : vector<1x3x14xf32> to vector<3x14xf32>
    %52 = vector.extract_strided_slice %37 {offsets = [1, 0, 2], sizes = [1, 3, 14], strides = [1, 1, 1]} : vector<3x3x16xf32> to vector<1x3x14xf32>
    %53 = vector.shape_cast %52 : vector<1x3x14xf32> to vector<3x14xf32>
    %54 = vector.extract_strided_slice %37 {offsets = [2, 0, 2], sizes = [1, 3, 14], strides = [1, 1, 1]} : vector<3x3x16xf32> to vector<1x3x14xf32>
    %55 = vector.shape_cast %54 : vector<1x3x14xf32> to vector<3x14xf32>
    %56 = tpu.concatenate %39, %41, %43, %45, %47, %49, %51, %53, %55 in 0 : vector<3x14xf32>, vector<3x14xf32>, vector<3x14xf32>, vector<3x14xf32>, vector<3x14xf32>, vector<3x14xf32>, vector<3x14xf32>, vector<3x14xf32>, vector<3x14xf32> -> vector<27x14xf32>
    %cst_14 = arith.constant dense<0.000000e+00> : vector<32x14xf32>
    %57 = tpu.matmul %0, %56, %cst_14 {dimension_numbers = #tpu.dot_dimension_numbers<[1], [0], [0], [1], [0, 0, 1, 1], [], []>} : vector<32x27xf32>, vector<27x14xf32>, vector<32x14xf32> -> vector<32x14xf32>
    %58 = vector.broadcast %1 : vector<32x1xf32> to vector<32x14xf32>
    %59 = arith.addf %57, %58 : vector<32x14xf32>
    %c0_15 = arith.constant 0 : index
    %c1 = arith.constant 1 : index
    %c0_16 = arith.constant 0 : index
    %c0_17 = arith.constant 0 : index
    %60 = vector.load %arg5[%c0_15, %c1, %c0_16, %c0_17] : memref<1x14x32x14xf32, #tpu.memory_space<vmem>>, vector<1x1x32x14xf32>
    %61 = vector.shape_cast %60 : vector<1x1x32x14xf32> to vector<32x14xf32>
    %62 = vector.shape_cast %59 : vector<32x14xf32> to vector<1x1x32x14xf32>
    tpu.vector_store %arg5[%c0_15, %c1, %c0_16, %c0_17], %62 {strides = array<i32>} : memref<1x14x32x14xf32, #tpu.memory_space<vmem>>, vector<1x1x32x14xf32>,
    %c2_i32 = arith.constant 2 : i32
    %63 = arith.addi %2, %c2_i32 : i32
    %c13_i32_18 = arith.constant 13 : i32
    %64 = arith.minsi %63, %c13_i32_18 : i32
    %c0_19 = arith.constant 0 : index
    %c0_20 = arith.constant 0 : index
    %65 = arith.index_cast %64 : i32 to index
    %c0_21 = arith.constant 0 : index
    %66 = vector.load %arg2[%c0_19, %c0_20, %65, %c0_21] : memref<1x3x16x16xf32, #tpu.memory_space<vmem>>, vector<1x3x3x16xf32>
    %67 = vector.shape_cast %66 : vector<1x3x3x16xf32> to vector<3x3x16xf32>
    %68 = vector.extract_strided_slice %67 {offsets = [0, 0, 0], sizes = [1, 3, 14], strides = [1, 1, 1]} : vector<3x3x16xf32> to vector<1x3x14xf32>
    %69 = vector.shape_cast %68 : vector<1x3x14xf32> to vector<3x14xf32>
    %70 = vector.extract_strided_slice %67 {offsets = [1, 0, 0], sizes = [1, 3, 14], strides = [1, 1, 1]} : vector<3x3x16xf32> to vector<1x3x14xf32>
    %71 = vector.shape_cast %70 : vector<1x3x14xf32> to vector<3x14xf32>
    %72 = vector.extract_strided_slice %67 {offsets = [2, 0, 0], sizes = [1, 3, 14], strides = [1, 1, 1]} : vector<3x3x16xf32> to vector<1x3x14xf32>
    %73 = vector.shape_cast %72 : vector<1x3x14xf32> to vector<3x14xf32>
    %74 = vector.extract_strided_slice %67 {offsets = [0, 0, 1], sizes = [1, 3, 14], strides = [1, 1, 1]} : vector<3x3x16xf32> to vector<1x3x14xf32>
    %75 = vector.shape_cast %74 : vector<1x3x14xf32> to vector<3x14xf32>
    %76 = vector.extract_strided_slice %67 {offsets = [1, 0, 1], sizes = [1, 3, 14], strides = [1, 1, 1]} : vector<3x3x16xf32> to vector<1x3x14xf32>
    %77 = vector.shape_cast %76 : vector<1x3x14xf32> to vector<3x14xf32>
    %78 = vector.extract_strided_slice %67 {offsets = [2, 0, 1], sizes = [1, 3, 14], strides = [1, 1, 1]} : vector<3x3x16xf32> to vector<1x3x14xf32>
    %79 = vector.shape_cast %78 : vector<1x3x14xf32> to vector<3x14xf32>
    %80 = vector.extract_strided_slice %67 {offsets = [0, 0, 2], sizes = [1, 3, 14], strides = [1, 1, 1]} : vector<3x3x16xf32> to vector<1x3x14xf32>
    %81 = vector.shape_cast %80 : vector<1x3x14xf32> to vector<3x14xf32>
    %82 = vector.extract_strided_slice %67 {offsets = [1, 0, 2], sizes = [1, 3, 14], strides = [1, 1, 1]} : vector<3x3x16xf32> to vector<1x3x14xf32>
    %83 = vector.shape_cast %82 : vector<1x3x14xf32> to vector<3x14xf32>
    %84 = vector.extract_strided_slice %67 {offsets = [2, 0, 2], sizes = [1, 3, 14], strides = [1, 1, 1]} : vector<3x3x16xf32> to vector<1x3x14xf32>
    %85 = vector.shape_cast %84 : vector<1x3x14xf32> to vector<3x14xf32>
    %86 = tpu.concatenate %69, %71, %73, %75, %77, %79, %81, %83, %85 in 0 : vector<3x14xf32>, vector<3x14xf32>, vector<3x14xf32>, vector<3x14xf32>, vector<3x14xf32>, vector<3x14xf32>, vector<3x14xf32>, vector<3x14xf32>, vector<3x14xf32> -> vector<27x14xf32>
    %cst_22 = arith.constant dense<0.000000e+00> : vector<32x14xf32>
    %87 = tpu.matmul %0, %86, %cst_22 {dimension_numbers = #tpu.dot_dimension_numbers<[1], [0], [0], [1], [0, 0, 1, 1], [], []>} : vector<32x27xf32>, vector<27x14xf32>, vector<32x14xf32> -> vector<32x14xf32>
    %88 = vector.broadcast %1 : vector<32x1xf32> to vector<32x14xf32>
    %89 = arith.addf %87, %88 : vector<32x14xf32>
    %c0_23 = arith.constant 0 : index
    %c2 = arith.constant 2 : index
    %c0_24 = arith.constant 0 : index
    %c0_25 = arith.constant 0 : index
    %90 = vector.load %arg5[%c0_23, %c2, %c0_24, %c0_25] : memref<1x14x32x14xf32, #tpu.memory_space<vmem>>, vector<1x1x32x14xf32>
    %91 = vector.shape_cast %90 : vector<1x1x32x14xf32> to vector<32x14xf32>
    %92 = vector.shape_cast %89 : vector<32x14xf32> to vector<1x1x32x14xf32>
    tpu.vector_store %arg5[%c0_23, %c2, %c0_24, %c0_25], %92 {strides = array<i32>} : memref<1x14x32x14xf32, #tpu.memory_space<vmem>>, vector<1x1x32x14xf32>,
    %c3_i32 = arith.constant 3 : i32
    %93 = arith.addi %2, %c3_i32 : i32
    %c13_i32_26 = arith.constant 13 : i32
    %94 = arith.minsi %93, %c13_i32_26 : i32
    %c0_27 = arith.constant 0 : index
    %c0_28 = arith.constant 0 : index
    %95 = arith.index_cast %94 : i32 to index
    %c0_29 = arith.constant 0 : index
    %96 = vector.load %arg2[%c0_27, %c0_28, %95, %c0_29] : memref<1x3x16x16xf32, #tpu.memory_space<vmem>>, vector<1x3x3x16xf32>
    %97 = vector.shape_cast %96 : vector<1x3x3x16xf32> to vector<3x3x16xf32>
    %98 = vector.extract_strided_slice %97 {offsets = [0, 0, 0], sizes = [1, 3, 14], strides = [1, 1, 1]} : vector<3x3x16xf32> to vector<1x3x14xf32>
    %99 = vector.shape_cast %98 : vector<1x3x14xf32> to vector<3x14xf32>
    %100 = vector.extract_strided_slice %97 {offsets = [1, 0, 0], sizes = [1, 3, 14], strides = [1, 1, 1]} : vector<3x3x16xf32> to vector<1x3x14xf32>
    %101 = vector.shape_cast %100 : vector<1x3x14xf32> to vector<3x14xf32>
    %102 = vector.extract_strided_slice %97 {offsets = [2, 0, 0], sizes = [1, 3, 14], strides = [1, 1, 1]} : vector<3x3x16xf32> to vector<1x3x14xf32>
    %103 = vector.shape_cast %102 : vector<1x3x14xf32> to vector<3x14xf32>
    %104 = vector.extract_strided_slice %97 {offsets = [0, 0, 1], sizes = [1, 3, 14], strides = [1, 1, 1]} : vector<3x3x16xf32> to vector<1x3x14xf32>
    %105 = vector.shape_cast %104 : vector<1x3x14xf32> to vector<3x14xf32>
    %106 = vector.extract_strided_slice %97 {offsets = [1, 0, 1], sizes = [1, 3, 14], strides = [1, 1, 1]} : vector<3x3x16xf32> to vector<1x3x14xf32>
    %107 = vector.shape_cast %106 : vector<1x3x14xf32> to vector<3x14xf32>
    %108 = vector.extract_strided_slice %97 {offsets = [2, 0, 1], sizes = [1, 3, 14], strides = [1, 1, 1]} : vector<3x3x16xf32> to vector<1x3x14xf32>
    %109 = vector.shape_cast %108 : vector<1x3x14xf32> to vector<3x14xf32>
    %110 = vector.extract_strided_slice %97 {offsets = [0, 0, 2], sizes = [1, 3, 14], strides = [1, 1, 1]} : vector<3x3x16xf32> to vector<1x3x14xf32>
    %111 = vector.shape_cast %110 : vector<1x3x14xf32> to vector<3x14xf32>
    %112 = vector.extract_strided_slice %97 {offsets = [1, 0, 2], sizes = [1, 3, 14], strides = [1, 1, 1]} : vector<3x3x16xf32> to vector<1x3x14xf32>
    %113 = vector.shape_cast %112 : vector<1x3x14xf32> to vector<3x14xf32>
    %114 = vector.extract_strided_slice %97 {offsets = [2, 0, 2], sizes = [1, 3, 14], strides = [1, 1, 1]} : vector<3x3x16xf32> to vector<1x3x14xf32>
    %115 = vector.shape_cast %114 : vector<1x3x14xf32> to vector<3x14xf32>
    %116 = tpu.concatenate %99, %101, %103, %105, %107, %109, %111, %113, %115 in 0 : vector<3x14xf32>, vector<3x14xf32>, vector<3x14xf32>, vector<3x14xf32>, vector<3x14xf32>, vector<3x14xf32>, vector<3x14xf32>, vector<3x14xf32>, vector<3x14xf32> -> vector<27x14xf32>
    %cst_30 = arith.constant dense<0.000000e+00> : vector<32x14xf32>
    %117 = tpu.matmul %0, %116, %cst_30 {dimension_numbers = #tpu.dot_dimension_numbers<[1], [0], [0], [1], [0, 0, 1, 1], [], []>} : vector<32x27xf32>, vector<27x14xf32>, vector<32x14xf32> -> vector<32x14xf32>
    %118 = vector.broadcast %1 : vector<32x1xf32> to vector<32x14xf32>
    %119 = arith.addf %117, %118 : vector<32x14xf32>
    %c0_31 = arith.constant 0 : index
    %c3 = arith.constant 3 : index
    %c0_32 = arith.constant 0 : index
    %c0_33 = arith.constant 0 : index
    %120 = vector.load %arg5[%c0_31, %c3, %c0_32, %c0_33] : memref<1x14x32x14xf32, #tpu.memory_space<vmem>>, vector<1x1x32x14xf32>
    %121 = vector.shape_cast %120 : vector<1x1x32x14xf32> to vector<32x14xf32>
    %122 = vector.shape_cast %119 : vector<32x14xf32> to vector<1x1x32x14xf32>
    tpu.vector_store %arg5[%c0_31, %c3, %c0_32, %c0_33], %122 {strides = array<i32>} : memref<1x14x32x14xf32, #tpu.memory_space<vmem>>, vector<1x1x32x14xf32>,
    %c4_i32 = arith.constant 4 : i32
    %123 = arith.addi %2, %c4_i32 : i32
    %c13_i32_34 = arith.constant 13 : i32
    %124 = arith.minsi %123, %c13_i32_34 : i32
    %c0_35 = arith.constant 0 : index
    %c0_36 = arith.constant 0 : index
    %125 = arith.index_cast %124 : i32 to index
    %c0_37 = arith.constant 0 : index
    %126 = vector.load %arg2[%c0_35, %c0_36, %125, %c0_37] : memref<1x3x16x16xf32, #tpu.memory_space<vmem>>, vector<1x3x3x16xf32>
    %127 = vector.shape_cast %126 : vector<1x3x3x16xf32> to vector<3x3x16xf32>
    %128 = vector.extract_strided_slice %127 {offsets = [0, 0, 0], sizes = [1, 3, 14], strides = [1, 1, 1]} : vector<3x3x16xf32> to vector<1x3x14xf32>
    %129 = vector.shape_cast %128 : vector<1x3x14xf32> to vector<3x14xf32>
    %130 = vector.extract_strided_slice %127 {offsets = [1, 0, 0], sizes = [1, 3, 14], strides = [1, 1, 1]} : vector<3x3x16xf32> to vector<1x3x14xf32>
    %131 = vector.shape_cast %130 : vector<1x3x14xf32> to vector<3x14xf32>
    %132 = vector.extract_strided_slice %127 {offsets = [2, 0, 0], sizes = [1, 3, 14], strides = [1, 1, 1]} : vector<3x3x16xf32> to vector<1x3x14xf32>
    %133 = vector.shape_cast %132 : vector<1x3x14xf32> to vector<3x14xf32>
    %134 = vector.extract_strided_slice %127 {offsets = [0, 0, 1], sizes = [1, 3, 14], strides = [1, 1, 1]} : vector<3x3x16xf32> to vector<1x3x14xf32>
    %135 = vector.shape_cast %134 : vector<1x3x14xf32> to vector<3x14xf32>
    %136 = vector.extract_strided_slice %127 {offsets = [1, 0, 1], sizes = [1, 3, 14], strides = [1, 1, 1]} : vector<3x3x16xf32> to vector<1x3x14xf32>
    %137 = vector.shape_cast %136 : vector<1x3x14xf32> to vector<3x14xf32>
    %138 = vector.extract_strided_slice %127 {offsets = [2, 0, 1], sizes = [1, 3, 14], strides = [1, 1, 1]} : vector<3x3x16xf32> to vector<1x3x14xf32>
    %139 = vector.shape_cast %138 : vector<1x3x14xf32> to vector<3x14xf32>
    %140 = vector.extract_strided_slice %127 {offsets = [0, 0, 2], sizes = [1, 3, 14], strides = [1, 1, 1]} : vector<3x3x16xf32> to vector<1x3x14xf32>
    %141 = vector.shape_cast %140 : vector<1x3x14xf32> to vector<3x14xf32>
    %142 = vector.extract_strided_slice %127 {offsets = [1, 0, 2], sizes = [1, 3, 14], strides = [1, 1, 1]} : vector<3x3x16xf32> to vector<1x3x14xf32>
    %143 = vector.shape_cast %142 : vector<1x3x14xf32> to vector<3x14xf32>
    %144 = vector.extract_strided_slice %127 {offsets = [2, 0, 2], sizes = [1, 3, 14], strides = [1, 1, 1]} : vector<3x3x16xf32> to vector<1x3x14xf32>
    %145 = vector.shape_cast %144 : vector<1x3x14xf32> to vector<3x14xf32>
    %146 = tpu.concatenate %129, %131, %133, %135, %137, %139, %141, %143, %145 in 0 : vector<3x14xf32>, vector<3x14xf32>, vector<3x14xf32>, vector<3x14xf32>, vector<3x14xf32>, vector<3x14xf32>, vector<3x14xf32>, vector<3x14xf32>, vector<3x14xf32> -> vector<27x14xf32>
    %cst_38 = arith.constant dense<0.000000e+00> : vector<32x14xf32>
    %147 = tpu.matmul %0, %146, %cst_38 {dimension_numbers = #tpu.dot_dimension_numbers<[1], [0], [0], [1], [0, 0, 1, 1], [], []>} : vector<32x27xf32>, vector<27x14xf32>, vector<32x14xf32> -> vector<32x14xf32>
    %148 = vector.broadcast %1 : vector<32x1xf32> to vector<32x14xf32>
    %149 = arith.addf %147, %148 : vector<32x14xf32>
    %c0_39 = arith.constant 0 : index
    %c4 = arith.constant 4 : index
    %c0_40 = arith.constant 0 : index
    %c0_41 = arith.constant 0 : index
    %150 = vector.load %arg5[%c0_39, %c4, %c0_40, %c0_41] : memref<1x14x32x14xf32, #tpu.memory_space<vmem>>, vector<1x1x32x14xf32>
    %151 = vector.shape_cast %150 : vector<1x1x32x14xf32> to vector<32x14xf32>
    %152 = vector.shape_cast %149 : vector<32x14xf32> to vector<1x1x32x14xf32>
    tpu.vector_store %arg5[%c0_39, %c4, %c0_40, %c0_41], %152 {strides = array<i32>} : memref<1x14x32x14xf32, #tpu.memory_space<vmem>>, vector<1x1x32x14xf32>,
    %c5_i32 = arith.constant 5 : i32
    %153 = arith.addi %2, %c5_i32 : i32
    %c13_i32_42 = arith.constant 13 : i32
    %154 = arith.minsi %153, %c13_i32_42 : i32
    %c0_43 = arith.constant 0 : index
    %c0_44 = arith.constant 0 : index
    %155 = arith.index_cast %154 : i32 to index
    %c0_45 = arith.constant 0 : index
    %156 = vector.load %arg2[%c0_43, %c0_44, %155, %c0_45] : memref<1x3x16x16xf32, #tpu.memory_space<vmem>>, vector<1x3x3x16xf32>
    %157 = vector.shape_cast %156 : vector<1x3x3x16xf32> to vector<3x3x16xf32>
    %158 = vector.extract_strided_slice %157 {offsets = [0, 0, 0], sizes = [1, 3, 14], strides = [1, 1, 1]} : vector<3x3x16xf32> to vector<1x3x14xf32>
    %159 = vector.shape_cast %158 : vector<1x3x14xf32> to vector<3x14xf32>
    %160 = vector.extract_strided_slice %157 {offsets = [1, 0, 0], sizes = [1, 3, 14], strides = [1, 1, 1]} : vector<3x3x16xf32> to vector<1x3x14xf32>
    %161 = vector.shape_cast %160 : vector<1x3x14xf32> to vector<3x14xf32>
    %162 = vector.extract_strided_slice %157 {offsets = [2, 0, 0], sizes = [1, 3, 14], strides = [1, 1, 1]} : vector<3x3x16xf32> to vector<1x3x14xf32>
    %163 = vector.shape_cast %162 : vector<1x3x14xf32> to vector<3x14xf32>
    %164 = vector.extract_strided_slice %157 {offsets = [0, 0, 1], sizes = [1, 3, 14], strides = [1, 1, 1]} : vector<3x3x16xf32> to vector<1x3x14xf32>
    %165 = vector.shape_cast %164 : vector<1x3x14xf32> to vector<3x14xf32>
    %166 = vector.extract_strided_slice %157 {offsets = [1, 0, 1], sizes = [1, 3, 14], strides = [1, 1, 1]} : vector<3x3x16xf32> to vector<1x3x14xf32>
    %167 = vector.shape_cast %166 : vector<1x3x14xf32> to vector<3x14xf32>
    %168 = vector.extract_strided_slice %157 {offsets = [2, 0, 1], sizes = [1, 3, 14], strides = [1, 1, 1]} : vector<3x3x16xf32> to vector<1x3x14xf32>
    %169 = vector.shape_cast %168 : vector<1x3x14xf32> to vector<3x14xf32>
    %170 = vector.extract_strided_slice %157 {offsets = [0, 0, 2], sizes = [1, 3, 14], strides = [1, 1, 1]} : vector<3x3x16xf32> to vector<1x3x14xf32>
    %171 = vector.shape_cast %170 : vector<1x3x14xf32> to vector<3x14xf32>
    %172 = vector.extract_strided_slice %157 {offsets = [1, 0, 2], sizes = [1, 3, 14], strides = [1, 1, 1]} : vector<3x3x16xf32> to vector<1x3x14xf32>
    %173 = vector.shape_cast %172 : vector<1x3x14xf32> to vector<3x14xf32>
    %174 = vector.extract_strided_slice %157 {offsets = [2, 0, 2], sizes = [1, 3, 14], strides = [1, 1, 1]} : vector<3x3x16xf32> to vector<1x3x14xf32>
    %175 = vector.shape_cast %174 : vector<1x3x14xf32> to vector<3x14xf32>
    %176 = tpu.concatenate %159, %161, %163, %165, %167, %169, %171, %173, %175 in 0 : vector<3x14xf32>, vector<3x14xf32>, vector<3x14xf32>, vector<3x14xf32>, vector<3x14xf32>, vector<3x14xf32>, vector<3x14xf32>, vector<3x14xf32>, vector<3x14xf32> -> vector<27x14xf32>
    %cst_46 = arith.constant dense<0.000000e+00> : vector<32x14xf32>
    %177 = tpu.matmul %0, %176, %cst_46 {dimension_numbers = #tpu.dot_dimension_numbers<[1], [0], [0], [1], [0, 0, 1, 1], [], []>} : vector<32x27xf32>, vector<27x14xf32>, vector<32x14xf32> -> vector<32x14xf32>
    %178 = vector.broadcast %1 : vector<32x1xf32> to vector<32x14xf32>
    %179 = arith.addf %177, %178 : vector<32x14xf32>
    %c0_47 = arith.constant 0 : index
    %c5 = arith.constant 5 : index
    %c0_48 = arith.constant 0 : index
    %c0_49 = arith.constant 0 : index
    %180 = vector.load %arg5[%c0_47, %c5, %c0_48, %c0_49] : memref<1x14x32x14xf32, #tpu.memory_space<vmem>>, vector<1x1x32x14xf32>
    %181 = vector.shape_cast %180 : vector<1x1x32x14xf32> to vector<32x14xf32>
    %182 = vector.shape_cast %179 : vector<32x14xf32> to vector<1x1x32x14xf32>
    tpu.vector_store %arg5[%c0_47, %c5, %c0_48, %c0_49], %182 {strides = array<i32>} : memref<1x14x32x14xf32, #tpu.memory_space<vmem>>, vector<1x1x32x14xf32>,
    %c6_i32 = arith.constant 6 : i32
    %183 = arith.addi %2, %c6_i32 : i32
    %c13_i32_50 = arith.constant 13 : i32
    %184 = arith.minsi %183, %c13_i32_50 : i32
    %c0_51 = arith.constant 0 : index
    %c0_52 = arith.constant 0 : index
    %185 = arith.index_cast %184 : i32 to index
    %c0_53 = arith.constant 0 : index
    %186 = vector.load %arg2[%c0_51, %c0_52, %185, %c0_53] : memref<1x3x16x16xf32, #tpu.memory_space<vmem>>, vector<1x3x3x16xf32>
    %187 = vector.shape_cast %186 : vector<1x3x3x16xf32> to vector<3x3x16xf32>
    %188 = vector.extract_strided_slice %187 {offsets = [0, 0, 0], sizes = [1, 3, 14], strides = [1, 1, 1]} : vector<3x3x16xf32> to vector<1x3x14xf32>
    %189 = vector.shape_cast %188 : vector<1x3x14xf32> to vector<3x14xf32>
    %190 = vector.extract_strided_slice %187 {offsets = [1, 0, 0], sizes = [1, 3, 14], strides = [1, 1, 1]} : vector<3x3x16xf32> to vector<1x3x14xf32>
    %191 = vector.shape_cast %190 : vector<1x3x14xf32> to vector<3x14xf32>
    %192 = vector.extract_strided_slice %187 {offsets = [2, 0, 0], sizes = [1, 3, 14], strides = [1, 1, 1]} : vector<3x3x16xf32> to vector<1x3x14xf32>
    %193 = vector.shape_cast %192 : vector<1x3x14xf32> to vector<3x14xf32>
    %194 = vector.extract_strided_slice %187 {offsets = [0, 0, 1], sizes = [1, 3, 14], strides = [1, 1, 1]} : vector<3x3x16xf32> to vector<1x3x14xf32>
    %195 = vector.shape_cast %194 : vector<1x3x14xf32> to vector<3x14xf32>
    %196 = vector.extract_strided_slice %187 {offsets = [1, 0, 1], sizes = [1, 3, 14], strides = [1, 1, 1]} : vector<3x3x16xf32> to vector<1x3x14xf32>
    %197 = vector.shape_cast %196 : vector<1x3x14xf32> to vector<3x14xf32>
    %198 = vector.extract_strided_slice %187 {offsets = [2, 0, 1], sizes = [1, 3, 14], strides = [1, 1, 1]} : vector<3x3x16xf32> to vector<1x3x14xf32>
    %199 = vector.shape_cast %198 : vector<1x3x14xf32> to vector<3x14xf32>
    %200 = vector.extract_strided_slice %187 {offsets = [0, 0, 2], sizes = [1, 3, 14], strides = [1, 1, 1]} : vector<3x3x16xf32> to vector<1x3x14xf32>
    %201 = vector.shape_cast %200 : vector<1x3x14xf32> to vector<3x14xf32>
    %202 = vector.extract_strided_slice %187 {offsets = [1, 0, 2], sizes = [1, 3, 14], strides = [1, 1, 1]} : vector<3x3x16xf32> to vector<1x3x14xf32>
    %203 = vector.shape_cast %202 : vector<1x3x14xf32> to vector<3x14xf32>
    %204 = vector.extract_strided_slice %187 {offsets = [2, 0, 2], sizes = [1, 3, 14], strides = [1, 1, 1]} : vector<3x3x16xf32> to vector<1x3x14xf32>
    %205 = vector.shape_cast %204 : vector<1x3x14xf32> to vector<3x14xf32>
    %206 = tpu.concatenate %189, %191, %193, %195, %197, %199, %201, %203, %205 in 0 : vector<3x14xf32>, vector<3x14xf32>, vector<3x14xf32>, vector<3x14xf32>, vector<3x14xf32>, vector<3x14xf32>, vector<3x14xf32>, vector<3x14xf32>, vector<3x14xf32> -> vector<27x14xf32>
    %cst_54 = arith.constant dense<0.000000e+00> : vector<32x14xf32>
    %207 = tpu.matmul %0, %206, %cst_54 {dimension_numbers = #tpu.dot_dimension_numbers<[1], [0], [0], [1], [0, 0, 1, 1], [], []>} : vector<32x27xf32>, vector<27x14xf32>, vector<32x14xf32> -> vector<32x14xf32>
    %208 = vector.broadcast %1 : vector<32x1xf32> to vector<32x14xf32>
    %209 = arith.addf %207, %208 : vector<32x14xf32>
    %c0_55 = arith.constant 0 : index
    %c6 = arith.constant 6 : index
    %c0_56 = arith.constant 0 : index
    %c0_57 = arith.constant 0 : index
    %210 = vector.load %arg5[%c0_55, %c6, %c0_56, %c0_57] : memref<1x14x32x14xf32, #tpu.memory_space<vmem>>, vector<1x1x32x14xf32>
    %211 = vector.shape_cast %210 : vector<1x1x32x14xf32> to vector<32x14xf32>
    %212 = vector.shape_cast %209 : vector<32x14xf32> to vector<1x1x32x14xf32>
    tpu.vector_store %arg5[%c0_55, %c6, %c0_56, %c0_57], %212 {strides = array<i32>} : memref<1x14x32x14xf32, #tpu.memory_space<vmem>>, vector<1x1x32x14xf32>,
    %c7_i32 = arith.constant 7 : i32
    %213 = arith.addi %2, %c7_i32 : i32
    %c13_i32_58 = arith.constant 13 : i32
    %214 = arith.minsi %213, %c13_i32_58 : i32
    %c0_59 = arith.constant 0 : index
    %c0_60 = arith.constant 0 : index
    %215 = arith.index_cast %214 : i32 to index
    %c0_61 = arith.constant 0 : index
    %216 = vector.load %arg2[%c0_59, %c0_60, %215, %c0_61] : memref<1x3x16x16xf32, #tpu.memory_space<vmem>>, vector<1x3x3x16xf32>
    %217 = vector.shape_cast %216 : vector<1x3x3x16xf32> to vector<3x3x16xf32>
    %218 = vector.extract_strided_slice %217 {offsets = [0, 0, 0], sizes = [1, 3, 14], strides = [1, 1, 1]} : vector<3x3x16xf32> to vector<1x3x14xf32>
    %219 = vector.shape_cast %218 : vector<1x3x14xf32> to vector<3x14xf32>
    %220 = vector.extract_strided_slice %217 {offsets = [1, 0, 0], sizes = [1, 3, 14], strides = [1, 1, 1]} : vector<3x3x16xf32> to vector<1x3x14xf32>
    %221 = vector.shape_cast %220 : vector<1x3x14xf32> to vector<3x14xf32>
    %222 = vector.extract_strided_slice %217 {offsets = [2, 0, 0], sizes = [1, 3, 14], strides = [1, 1, 1]} : vector<3x3x16xf32> to vector<1x3x14xf32>
    %223 = vector.shape_cast %222 : vector<1x3x14xf32> to vector<3x14xf32>
    %224 = vector.extract_strided_slice %217 {offsets = [0, 0, 1], sizes = [1, 3, 14], strides = [1, 1, 1]} : vector<3x3x16xf32> to vector<1x3x14xf32>
    %225 = vector.shape_cast %224 : vector<1x3x14xf32> to vector<3x14xf32>
    %226 = vector.extract_strided_slice %217 {offsets = [1, 0, 1], sizes = [1, 3, 14], strides = [1, 1, 1]} : vector<3x3x16xf32> to vector<1x3x14xf32>
    %227 = vector.shape_cast %226 : vector<1x3x14xf32> to vector<3x14xf32>
    %228 = vector.extract_strided_slice %217 {offsets = [2, 0, 1], sizes = [1, 3, 14], strides = [1, 1, 1]} : vector<3x3x16xf32> to vector<1x3x14xf32>
    %229 = vector.shape_cast %228 : vector<1x3x14xf32> to vector<3x14xf32>
    %230 = vector.extract_strided_slice %217 {offsets = [0, 0, 2], sizes = [1, 3, 14], strides = [1, 1, 1]} : vector<3x3x16xf32> to vector<1x3x14xf32>
    %231 = vector.shape_cast %230 : vector<1x3x14xf32> to vector<3x14xf32>
    %232 = vector.extract_strided_slice %217 {offsets = [1, 0, 2], sizes = [1, 3, 14], strides = [1, 1, 1]} : vector<3x3x16xf32> to vector<1x3x14xf32>
    %233 = vector.shape_cast %232 : vector<1x3x14xf32> to vector<3x14xf32>
    %234 = vector.extract_strided_slice %217 {offsets = [2, 0, 2], sizes = [1, 3, 14], strides = [1, 1, 1]} : vector<3x3x16xf32> to vector<1x3x14xf32>
    %235 = vector.shape_cast %234 : vector<1x3x14xf32> to vector<3x14xf32>
    %236 = tpu.concatenate %219, %221, %223, %225, %227, %229, %231, %233, %235 in 0 : vector<3x14xf32>, vector<3x14xf32>, vector<3x14xf32>, vector<3x14xf32>, vector<3x14xf32>, vector<3x14xf32>, vector<3x14xf32>, vector<3x14xf32>, vector<3x14xf32> -> vector<27x14xf32>
    %cst_62 = arith.constant dense<0.000000e+00> : vector<32x14xf32>
    %237 = tpu.matmul %0, %236, %cst_62 {dimension_numbers = #tpu.dot_dimension_numbers<[1], [0], [0], [1], [0, 0, 1, 1], [], []>} : vector<32x27xf32>, vector<27x14xf32>, vector<32x14xf32> -> vector<32x14xf32>
    %238 = vector.broadcast %1 : vector<32x1xf32> to vector<32x14xf32>
    %239 = arith.addf %237, %238 : vector<32x14xf32>
    %c0_63 = arith.constant 0 : index
    %c7 = arith.constant 7 : index
    %c0_64 = arith.constant 0 : index
    %c0_65 = arith.constant 0 : index
    %240 = vector.load %arg5[%c0_63, %c7, %c0_64, %c0_65] : memref<1x14x32x14xf32, #tpu.memory_space<vmem>>, vector<1x1x32x14xf32>
    %241 = vector.shape_cast %240 : vector<1x1x32x14xf32> to vector<32x14xf32>
    %242 = vector.shape_cast %239 : vector<32x14xf32> to vector<1x1x32x14xf32>
    tpu.vector_store %arg5[%c0_63, %c7, %c0_64, %c0_65], %242 {strides = array<i32>} : memref<1x14x32x14xf32, #tpu.memory_space<vmem>>, vector<1x1x32x14xf32>,
    %c8_i32 = arith.constant 8 : i32
    %243 = arith.addi %2, %c8_i32 : i32
    %c13_i32_66 = arith.constant 13 : i32
    %244 = arith.minsi %243, %c13_i32_66 : i32
    %c0_67 = arith.constant 0 : index
    %c0_68 = arith.constant 0 : index
    %245 = arith.index_cast %244 : i32 to index
    %c0_69 = arith.constant 0 : index
    %246 = vector.load %arg2[%c0_67, %c0_68, %245, %c0_69] : memref<1x3x16x16xf32, #tpu.memory_space<vmem>>, vector<1x3x3x16xf32>
    %247 = vector.shape_cast %246 : vector<1x3x3x16xf32> to vector<3x3x16xf32>
    %248 = vector.extract_strided_slice %247 {offsets = [0, 0, 0], sizes = [1, 3, 14], strides = [1, 1, 1]} : vector<3x3x16xf32> to vector<1x3x14xf32>
    %249 = vector.shape_cast %248 : vector<1x3x14xf32> to vector<3x14xf32>
    %250 = vector.extract_strided_slice %247 {offsets = [1, 0, 0], sizes = [1, 3, 14], strides = [1, 1, 1]} : vector<3x3x16xf32> to vector<1x3x14xf32>
    %251 = vector.shape_cast %250 : vector<1x3x14xf32> to vector<3x14xf32>
    %252 = vector.extract_strided_slice %247 {offsets = [2, 0, 0], sizes = [1, 3, 14], strides = [1, 1, 1]} : vector<3x3x16xf32> to vector<1x3x14xf32>
    %253 = vector.shape_cast %252 : vector<1x3x14xf32> to vector<3x14xf32>
    %254 = vector.extract_strided_slice %247 {offsets = [0, 0, 1], sizes = [1, 3, 14], strides = [1, 1, 1]} : vector<3x3x16xf32> to vector<1x3x14xf32>
    %255 = vector.shape_cast %254 : vector<1x3x14xf32> to vector<3x14xf32>
    %256 = vector.extract_strided_slice %247 {offsets = [1, 0, 1], sizes = [1, 3, 14], strides = [1, 1, 1]} : vector<3x3x16xf32> to vector<1x3x14xf32>
    %257 = vector.shape_cast %256 : vector<1x3x14xf32> to vector<3x14xf32>
    %258 = vector.extract_strided_slice %247 {offsets = [2, 0, 1], sizes = [1, 3, 14], strides = [1, 1, 1]} : vector<3x3x16xf32> to vector<1x3x14xf32>
    %259 = vector.shape_cast %258 : vector<1x3x14xf32> to vector<3x14xf32>
    %260 = vector.extract_strided_slice %247 {offsets = [0, 0, 2], sizes = [1, 3, 14], strides = [1, 1, 1]} : vector<3x3x16xf32> to vector<1x3x14xf32>
    %261 = vector.shape_cast %260 : vector<1x3x14xf32> to vector<3x14xf32>
    %262 = vector.extract_strided_slice %247 {offsets = [1, 0, 2], sizes = [1, 3, 14], strides = [1, 1, 1]} : vector<3x3x16xf32> to vector<1x3x14xf32>
    %263 = vector.shape_cast %262 : vector<1x3x14xf32> to vector<3x14xf32>
    %264 = vector.extract_strided_slice %247 {offsets = [2, 0, 2], sizes = [1, 3, 14], strides = [1, 1, 1]} : vector<3x3x16xf32> to vector<1x3x14xf32>
    %265 = vector.shape_cast %264 : vector<1x3x14xf32> to vector<3x14xf32>
    %266 = tpu.concatenate %249, %251, %253, %255, %257, %259, %261, %263, %265 in 0 : vector<3x14xf32>, vector<3x14xf32>, vector<3x14xf32>, vector<3x14xf32>, vector<3x14xf32>, vector<3x14xf32>, vector<3x14xf32>, vector<3x14xf32>, vector<3x14xf32> -> vector<27x14xf32>
    %cst_70 = arith.constant dense<0.000000e+00> : vector<32x14xf32>
    %267 = tpu.matmul %0, %266, %cst_70 {dimension_numbers = #tpu.dot_dimension_numbers<[1], [0], [0], [1], [0, 0, 1, 1], [], []>} : vector<32x27xf32>, vector<27x14xf32>, vector<32x14xf32> -> vector<32x14xf32>
    %268 = vector.broadcast %1 : vector<32x1xf32> to vector<32x14xf32>
    %269 = arith.addf %267, %268 : vector<32x14xf32>
    %c0_71 = arith.constant 0 : index
    %c8 = arith.constant 8 : index
    %c0_72 = arith.constant 0 : index
    %c0_73 = arith.constant 0 : index
    %270 = vector.load %arg5[%c0_71, %c8, %c0_72, %c0_73] : memref<1x14x32x14xf32, #tpu.memory_space<vmem>>, vector<1x1x32x14xf32>
    %271 = vector.shape_cast %270 : vector<1x1x32x14xf32> to vector<32x14xf32>
    %272 = vector.shape_cast %269 : vector<32x14xf32> to vector<1x1x32x14xf32>
    tpu.vector_store %arg5[%c0_71, %c8, %c0_72, %c0_73], %272 {strides = array<i32>} : memref<1x14x32x14xf32, #tpu.memory_space<vmem>>, vector<1x1x32x14xf32>,
    %c9_i32 = arith.constant 9 : i32
    %273 = arith.addi %2, %c9_i32 : i32
    %c13_i32_74 = arith.constant 13 : i32
    %274 = arith.minsi %273, %c13_i32_74 : i32
    %c0_75 = arith.constant 0 : index
    %c0_76 = arith.constant 0 : index
    %275 = arith.index_cast %274 : i32 to index
    %c0_77 = arith.constant 0 : index
    %276 = vector.load %arg2[%c0_75, %c0_76, %275, %c0_77] : memref<1x3x16x16xf32, #tpu.memory_space<vmem>>, vector<1x3x3x16xf32>
    %277 = vector.shape_cast %276 : vector<1x3x3x16xf32> to vector<3x3x16xf32>
    %278 = vector.extract_strided_slice %277 {offsets = [0, 0, 0], sizes = [1, 3, 14], strides = [1, 1, 1]} : vector<3x3x16xf32> to vector<1x3x14xf32>
    %279 = vector.shape_cast %278 : vector<1x3x14xf32> to vector<3x14xf32>
    %280 = vector.extract_strided_slice %277 {offsets = [1, 0, 0], sizes = [1, 3, 14], strides = [1, 1, 1]} : vector<3x3x16xf32> to vector<1x3x14xf32>
    %281 = vector.shape_cast %280 : vector<1x3x14xf32> to vector<3x14xf32>
    %282 = vector.extract_strided_slice %277 {offsets = [2, 0, 0], sizes = [1, 3, 14], strides = [1, 1, 1]} : vector<3x3x16xf32> to vector<1x3x14xf32>
    %283 = vector.shape_cast %282 : vector<1x3x14xf32> to vector<3x14xf32>
    %284 = vector.extract_strided_slice %277 {offsets = [0, 0, 1], sizes = [1, 3, 14], strides = [1, 1, 1]} : vector<3x3x16xf32> to vector<1x3x14xf32>
    %285 = vector.shape_cast %284 : vector<1x3x14xf32> to vector<3x14xf32>
    %286 = vector.extract_strided_slice %277 {offsets = [1, 0, 1], sizes = [1, 3, 14], strides = [1, 1, 1]} : vector<3x3x16xf32> to vector<1x3x14xf32>
    %287 = vector.shape_cast %286 : vector<1x3x14xf32> to vector<3x14xf32>
    %288 = vector.extract_strided_slice %277 {offsets = [2, 0, 1], sizes = [1, 3, 14], strides = [1, 1, 1]} : vector<3x3x16xf32> to vector<1x3x14xf32>
    %289 = vector.shape_cast %288 : vector<1x3x14xf32> to vector<3x14xf32>
    %290 = vector.extract_strided_slice %277 {offsets = [0, 0, 2], sizes = [1, 3, 14], strides = [1, 1, 1]} : vector<3x3x16xf32> to vector<1x3x14xf32>
    %291 = vector.shape_cast %290 : vector<1x3x14xf32> to vector<3x14xf32>
    %292 = vector.extract_strided_slice %277 {offsets = [1, 0, 2], sizes = [1, 3, 14], strides = [1, 1, 1]} : vector<3x3x16xf32> to vector<1x3x14xf32>
    %293 = vector.shape_cast %292 : vector<1x3x14xf32> to vector<3x14xf32>
    %294 = vector.extract_strided_slice %277 {offsets = [2, 0, 2], sizes = [1, 3, 14], strides = [1, 1, 1]} : vector<3x3x16xf32> to vector<1x3x14xf32>
    %295 = vector.shape_cast %294 : vector<1x3x14xf32> to vector<3x14xf32>
    %296 = tpu.concatenate %279, %281, %283, %285, %287, %289, %291, %293, %295 in 0 : vector<3x14xf32>, vector<3x14xf32>, vector<3x14xf32>, vector<3x14xf32>, vector<3x14xf32>, vector<3x14xf32>, vector<3x14xf32>, vector<3x14xf32>, vector<3x14xf32> -> vector<27x14xf32>
    %cst_78 = arith.constant dense<0.000000e+00> : vector<32x14xf32>
    %297 = tpu.matmul %0, %296, %cst_78 {dimension_numbers = #tpu.dot_dimension_numbers<[1], [0], [0], [1], [0, 0, 1, 1], [], []>} : vector<32x27xf32>, vector<27x14xf32>, vector<32x14xf32> -> vector<32x14xf32>
    %298 = vector.broadcast %1 : vector<32x1xf32> to vector<32x14xf32>
    %299 = arith.addf %297, %298 : vector<32x14xf32>
    %c0_79 = arith.constant 0 : index
    %c9 = arith.constant 9 : index
    %c0_80 = arith.constant 0 : index
    %c0_81 = arith.constant 0 : index
    %300 = vector.load %arg5[%c0_79, %c9, %c0_80, %c0_81] : memref<1x14x32x14xf32, #tpu.memory_space<vmem>>, vector<1x1x32x14xf32>
    %301 = vector.shape_cast %300 : vector<1x1x32x14xf32> to vector<32x14xf32>
    %302 = vector.shape_cast %299 : vector<32x14xf32> to vector<1x1x32x14xf32>
    tpu.vector_store %arg5[%c0_79, %c9, %c0_80, %c0_81], %302 {strides = array<i32>} : memref<1x14x32x14xf32, #tpu.memory_space<vmem>>, vector<1x1x32x14xf32>,
    %c10_i32 = arith.constant 10 : i32
    %303 = arith.addi %2, %c10_i32 : i32
    %c13_i32_82 = arith.constant 13 : i32
    %304 = arith.minsi %303, %c13_i32_82 : i32
    %c0_83 = arith.constant 0 : index
    %c0_84 = arith.constant 0 : index
    %305 = arith.index_cast %304 : i32 to index
    %c0_85 = arith.constant 0 : index
    %306 = vector.load %arg2[%c0_83, %c0_84, %305, %c0_85] : memref<1x3x16x16xf32, #tpu.memory_space<vmem>>, vector<1x3x3x16xf32>
    %307 = vector.shape_cast %306 : vector<1x3x3x16xf32> to vector<3x3x16xf32>
    %308 = vector.extract_strided_slice %307 {offsets = [0, 0, 0], sizes = [1, 3, 14], strides = [1, 1, 1]} : vector<3x3x16xf32> to vector<1x3x14xf32>
    %309 = vector.shape_cast %308 : vector<1x3x14xf32> to vector<3x14xf32>
    %310 = vector.extract_strided_slice %307 {offsets = [1, 0, 0], sizes = [1, 3, 14], strides = [1, 1, 1]} : vector<3x3x16xf32> to vector<1x3x14xf32>
    %311 = vector.shape_cast %310 : vector<1x3x14xf32> to vector<3x14xf32>
    %312 = vector.extract_strided_slice %307 {offsets = [2, 0, 0], sizes = [1, 3, 14], strides = [1, 1, 1]} : vector<3x3x16xf32> to vector<1x3x14xf32>
    %313 = vector.shape_cast %312 : vector<1x3x14xf32> to vector<3x14xf32>
    %314 = vector.extract_strided_slice %307 {offsets = [0, 0, 1], sizes = [1, 3, 14], strides = [1, 1, 1]} : vector<3x3x16xf32> to vector<1x3x14xf32>
    %315 = vector.shape_cast %314 : vector<1x3x14xf32> to vector<3x14xf32>
    %316 = vector.extract_strided_slice %307 {offsets = [1, 0, 1], sizes = [1, 3, 14], strides = [1, 1, 1]} : vector<3x3x16xf32> to vector<1x3x14xf32>
    %317 = vector.shape_cast %316 : vector<1x3x14xf32> to vector<3x14xf32>
    %318 = vector.extract_strided_slice %307 {offsets = [2, 0, 1], sizes = [1, 3, 14], strides = [1, 1, 1]} : vector<3x3x16xf32> to vector<1x3x14xf32>
    %319 = vector.shape_cast %318 : vector<1x3x14xf32> to vector<3x14xf32>
    %320 = vector.extract_strided_slice %307 {offsets = [0, 0, 2], sizes = [1, 3, 14], strides = [1, 1, 1]} : vector<3x3x16xf32> to vector<1x3x14xf32>
    %321 = vector.shape_cast %320 : vector<1x3x14xf32> to vector<3x14xf32>
    %322 = vector.extract_strided_slice %307 {offsets = [1, 0, 2], sizes = [1, 3, 14], strides = [1, 1, 1]} : vector<3x3x16xf32> to vector<1x3x14xf32>
    %323 = vector.shape_cast %322 : vector<1x3x14xf32> to vector<3x14xf32>
    %324 = vector.extract_strided_slice %307 {offsets = [2, 0, 2], sizes = [1, 3, 14], strides = [1, 1, 1]} : vector<3x3x16xf32> to vector<1x3x14xf32>
    %325 = vector.shape_cast %324 : vector<1x3x14xf32> to vector<3x14xf32>
    %326 = tpu.concatenate %309, %311, %313, %315, %317, %319, %321, %323, %325 in 0 : vector<3x14xf32>, vector<3x14xf32>, vector<3x14xf32>, vector<3x14xf32>, vector<3x14xf32>, vector<3x14xf32>, vector<3x14xf32>, vector<3x14xf32>, vector<3x14xf32> -> vector<27x14xf32>
    %cst_86 = arith.constant dense<0.000000e+00> : vector<32x14xf32>
    %327 = tpu.matmul %0, %326, %cst_86 {dimension_numbers = #tpu.dot_dimension_numbers<[1], [0], [0], [1], [0, 0, 1, 1], [], []>} : vector<32x27xf32>, vector<27x14xf32>, vector<32x14xf32> -> vector<32x14xf32>
    %328 = vector.broadcast %1 : vector<32x1xf32> to vector<32x14xf32>
    %329 = arith.addf %327, %328 : vector<32x14xf32>
    %c0_87 = arith.constant 0 : index
    %c10 = arith.constant 10 : index
    %c0_88 = arith.constant 0 : index
    %c0_89 = arith.constant 0 : index
    %330 = vector.load %arg5[%c0_87, %c10, %c0_88, %c0_89] : memref<1x14x32x14xf32, #tpu.memory_space<vmem>>, vector<1x1x32x14xf32>
    %331 = vector.shape_cast %330 : vector<1x1x32x14xf32> to vector<32x14xf32>
    %332 = vector.shape_cast %329 : vector<32x14xf32> to vector<1x1x32x14xf32>
    tpu.vector_store %arg5[%c0_87, %c10, %c0_88, %c0_89], %332 {strides = array<i32>} : memref<1x14x32x14xf32, #tpu.memory_space<vmem>>, vector<1x1x32x14xf32>,
    %c11_i32 = arith.constant 11 : i32
    %333 = arith.addi %2, %c11_i32 : i32
    %c13_i32_90 = arith.constant 13 : i32
    %334 = arith.minsi %333, %c13_i32_90 : i32
    %c0_91 = arith.constant 0 : index
    %c0_92 = arith.constant 0 : index
    %335 = arith.index_cast %334 : i32 to index
    %c0_93 = arith.constant 0 : index
    %336 = vector.load %arg2[%c0_91, %c0_92, %335, %c0_93] : memref<1x3x16x16xf32, #tpu.memory_space<vmem>>, vector<1x3x3x16xf32>
    %337 = vector.shape_cast %336 : vector<1x3x3x16xf32> to vector<3x3x16xf32>
    %338 = vector.extract_strided_slice %337 {offsets = [0, 0, 0], sizes = [1, 3, 14], strides = [1, 1, 1]} : vector<3x3x16xf32> to vector<1x3x14xf32>
    %339 = vector.shape_cast %338 : vector<1x3x14xf32> to vector<3x14xf32>
    %340 = vector.extract_strided_slice %337 {offsets = [1, 0, 0], sizes = [1, 3, 14], strides = [1, 1, 1]} : vector<3x3x16xf32> to vector<1x3x14xf32>
    %341 = vector.shape_cast %340 : vector<1x3x14xf32> to vector<3x14xf32>
    %342 = vector.extract_strided_slice %337 {offsets = [2, 0, 0], sizes = [1, 3, 14], strides = [1, 1, 1]} : vector<3x3x16xf32> to vector<1x3x14xf32>
    %343 = vector.shape_cast %342 : vector<1x3x14xf32> to vector<3x14xf32>
    %344 = vector.extract_strided_slice %337 {offsets = [0, 0, 1], sizes = [1, 3, 14], strides = [1, 1, 1]} : vector<3x3x16xf32> to vector<1x3x14xf32>
    %345 = vector.shape_cast %344 : vector<1x3x14xf32> to vector<3x14xf32>
    %346 = vector.extract_strided_slice %337 {offsets = [1, 0, 1], sizes = [1, 3, 14], strides = [1, 1, 1]} : vector<3x3x16xf32> to vector<1x3x14xf32>
    %347 = vector.shape_cast %346 : vector<1x3x14xf32> to vector<3x14xf32>
    %348 = vector.extract_strided_slice %337 {offsets = [2, 0, 1], sizes = [1, 3, 14], strides = [1, 1, 1]} : vector<3x3x16xf32> to vector<1x3x14xf32>
    %349 = vector.shape_cast %348 : vector<1x3x14xf32> to vector<3x14xf32>
    %350 = vector.extract_strided_slice %337 {offsets = [0, 0, 2], sizes = [1, 3, 14], strides = [1, 1, 1]} : vector<3x3x16xf32> to vector<1x3x14xf32>
    %351 = vector.shape_cast %350 : vector<1x3x14xf32> to vector<3x14xf32>
    %352 = vector.extract_strided_slice %337 {offsets = [1, 0, 2], sizes = [1, 3, 14], strides = [1, 1, 1]} : vector<3x3x16xf32> to vector<1x3x14xf32>
    %353 = vector.shape_cast %352 : vector<1x3x14xf32> to vector<3x14xf32>
    %354 = vector.extract_strided_slice %337 {offsets = [2, 0, 2], sizes = [1, 3, 14], strides = [1, 1, 1]} : vector<3x3x16xf32> to vector<1x3x14xf32>
    %355 = vector.shape_cast %354 : vector<1x3x14xf32> to vector<3x14xf32>
    %356 = tpu.concatenate %339, %341, %343, %345, %347, %349, %351, %353, %355 in 0 : vector<3x14xf32>, vector<3x14xf32>, vector<3x14xf32>, vector<3x14xf32>, vector<3x14xf32>, vector<3x14xf32>, vector<3x14xf32>, vector<3x14xf32>, vector<3x14xf32> -> vector<27x14xf32>
    %cst_94 = arith.constant dense<0.000000e+00> : vector<32x14xf32>
    %357 = tpu.matmul %0, %356, %cst_94 {dimension_numbers = #tpu.dot_dimension_numbers<[1], [0], [0], [1], [0, 0, 1, 1], [], []>} : vector<32x27xf32>, vector<27x14xf32>, vector<32x14xf32> -> vector<32x14xf32>
    %358 = vector.broadcast %1 : vector<32x1xf32> to vector<32x14xf32>
    %359 = arith.addf %357, %358 : vector<32x14xf32>
    %c0_95 = arith.constant 0 : index
    %c11 = arith.constant 11 : index
    %c0_96 = arith.constant 0 : index
    %c0_97 = arith.constant 0 : index
    %360 = vector.load %arg5[%c0_95, %c11, %c0_96, %c0_97] : memref<1x14x32x14xf32, #tpu.memory_space<vmem>>, vector<1x1x32x14xf32>
    %361 = vector.shape_cast %360 : vector<1x1x32x14xf32> to vector<32x14xf32>
    %362 = vector.shape_cast %359 : vector<32x14xf32> to vector<1x1x32x14xf32>
    tpu.vector_store %arg5[%c0_95, %c11, %c0_96, %c0_97], %362 {strides = array<i32>} : memref<1x14x32x14xf32, #tpu.memory_space<vmem>>, vector<1x1x32x14xf32>,
    %c12_i32 = arith.constant 12 : i32
    %363 = arith.addi %2, %c12_i32 : i32
    %c13_i32_98 = arith.constant 13 : i32
    %364 = arith.minsi %363, %c13_i32_98 : i32
    %c0_99 = arith.constant 0 : index
    %c0_100 = arith.constant 0 : index
    %365 = arith.index_cast %364 : i32 to index
    %c0_101 = arith.constant 0 : index
    %366 = vector.load %arg2[%c0_99, %c0_100, %365, %c0_101] : memref<1x3x16x16xf32, #tpu.memory_space<vmem>>, vector<1x3x3x16xf32>
    %367 = vector.shape_cast %366 : vector<1x3x3x16xf32> to vector<3x3x16xf32>
    %368 = vector.extract_strided_slice %367 {offsets = [0, 0, 0], sizes = [1, 3, 14], strides = [1, 1, 1]} : vector<3x3x16xf32> to vector<1x3x14xf32>
    %369 = vector.shape_cast %368 : vector<1x3x14xf32> to vector<3x14xf32>
    %370 = vector.extract_strided_slice %367 {offsets = [1, 0, 0], sizes = [1, 3, 14], strides = [1, 1, 1]} : vector<3x3x16xf32> to vector<1x3x14xf32>
    %371 = vector.shape_cast %370 : vector<1x3x14xf32> to vector<3x14xf32>
    %372 = vector.extract_strided_slice %367 {offsets = [2, 0, 0], sizes = [1, 3, 14], strides = [1, 1, 1]} : vector<3x3x16xf32> to vector<1x3x14xf32>
    %373 = vector.shape_cast %372 : vector<1x3x14xf32> to vector<3x14xf32>
    %374 = vector.extract_strided_slice %367 {offsets = [0, 0, 1], sizes = [1, 3, 14], strides = [1, 1, 1]} : vector<3x3x16xf32> to vector<1x3x14xf32>
    %375 = vector.shape_cast %374 : vector<1x3x14xf32> to vector<3x14xf32>
    %376 = vector.extract_strided_slice %367 {offsets = [1, 0, 1], sizes = [1, 3, 14], strides = [1, 1, 1]} : vector<3x3x16xf32> to vector<1x3x14xf32>
    %377 = vector.shape_cast %376 : vector<1x3x14xf32> to vector<3x14xf32>
    %378 = vector.extract_strided_slice %367 {offsets = [2, 0, 1], sizes = [1, 3, 14], strides = [1, 1, 1]} : vector<3x3x16xf32> to vector<1x3x14xf32>
    %379 = vector.shape_cast %378 : vector<1x3x14xf32> to vector<3x14xf32>
    %380 = vector.extract_strided_slice %367 {offsets = [0, 0, 2], sizes = [1, 3, 14], strides = [1, 1, 1]} : vector<3x3x16xf32> to vector<1x3x14xf32>
    %381 = vector.shape_cast %380 : vector<1x3x14xf32> to vector<3x14xf32>
    %382 = vector.extract_strided_slice %367 {offsets = [1, 0, 2], sizes = [1, 3, 14], strides = [1, 1, 1]} : vector<3x3x16xf32> to vector<1x3x14xf32>
    %383 = vector.shape_cast %382 : vector<1x3x14xf32> to vector<3x14xf32>
    %384 = vector.extract_strided_slice %367 {offsets = [2, 0, 2], sizes = [1, 3, 14], strides = [1, 1, 1]} : vector<3x3x16xf32> to vector<1x3x14xf32>
    %385 = vector.shape_cast %384 : vector<1x3x14xf32> to vector<3x14xf32>
    %386 = tpu.concatenate %369, %371, %373, %375, %377, %379, %381, %383, %385 in 0 : vector<3x14xf32>, vector<3x14xf32>, vector<3x14xf32>, vector<3x14xf32>, vector<3x14xf32>, vector<3x14xf32>, vector<3x14xf32>, vector<3x14xf32>, vector<3x14xf32> -> vector<27x14xf32>
    %cst_102 = arith.constant dense<0.000000e+00> : vector<32x14xf32>
    %387 = tpu.matmul %0, %386, %cst_102 {dimension_numbers = #tpu.dot_dimension_numbers<[1], [0], [0], [1], [0, 0, 1, 1], [], []>} : vector<32x27xf32>, vector<27x14xf32>, vector<32x14xf32> -> vector<32x14xf32>
    %388 = vector.broadcast %1 : vector<32x1xf32> to vector<32x14xf32>
    %389 = arith.addf %387, %388 : vector<32x14xf32>
    %c0_103 = arith.constant 0 : index
    %c12 = arith.constant 12 : index
    %c0_104 = arith.constant 0 : index
    %c0_105 = arith.constant 0 : index
    %390 = vector.load %arg5[%c0_103, %c12, %c0_104, %c0_105] : memref<1x14x32x14xf32, #tpu.memory_space<vmem>>, vector<1x1x32x14xf32>
    %391 = vector.shape_cast %390 : vector<1x1x32x14xf32> to vector<32x14xf32>
    %392 = vector.shape_cast %389 : vector<32x14xf32> to vector<1x1x32x14xf32>
    tpu.vector_store %arg5[%c0_103, %c12, %c0_104, %c0_105], %392 {strides = array<i32>} : memref<1x14x32x14xf32, #tpu.memory_space<vmem>>, vector<1x1x32x14xf32>,
    %c13_i32_106 = arith.constant 13 : i32
    %393 = arith.addi %2, %c13_i32_106 : i32
    %c13_i32_107 = arith.constant 13 : i32
    %394 = arith.minsi %393, %c13_i32_107 : i32
    %c0_108 = arith.constant 0 : index
    %c0_109 = arith.constant 0 : index
    %395 = arith.index_cast %394 : i32 to index
    %c0_110 = arith.constant 0 : index
    %396 = vector.load %arg2[%c0_108, %c0_109, %395, %c0_110] : memref<1x3x16x16xf32, #tpu.memory_space<vmem>>, vector<1x3x3x16xf32>
    %397 = vector.shape_cast %396 : vector<1x3x3x16xf32> to vector<3x3x16xf32>
    %398 = vector.extract_strided_slice %397 {offsets = [0, 0, 0], sizes = [1, 3, 14], strides = [1, 1, 1]} : vector<3x3x16xf32> to vector<1x3x14xf32>
    %399 = vector.shape_cast %398 : vector<1x3x14xf32> to vector<3x14xf32>
    %400 = vector.extract_strided_slice %397 {offsets = [1, 0, 0], sizes = [1, 3, 14], strides = [1, 1, 1]} : vector<3x3x16xf32> to vector<1x3x14xf32>
    %401 = vector.shape_cast %400 : vector<1x3x14xf32> to vector<3x14xf32>
    %402 = vector.extract_strided_slice %397 {offsets = [2, 0, 0], sizes = [1, 3, 14], strides = [1, 1, 1]} : vector<3x3x16xf32> to vector<1x3x14xf32>
    %403 = vector.shape_cast %402 : vector<1x3x14xf32> to vector<3x14xf32>
    %404 = vector.extract_strided_slice %397 {offsets = [0, 0, 1], sizes = [1, 3, 14], strides = [1, 1, 1]} : vector<3x3x16xf32> to vector<1x3x14xf32>
    %405 = vector.shape_cast %404 : vector<1x3x14xf32> to vector<3x14xf32>
    %406 = vector.extract_strided_slice %397 {offsets = [1, 0, 1], sizes = [1, 3, 14], strides = [1, 1, 1]} : vector<3x3x16xf32> to vector<1x3x14xf32>
    %407 = vector.shape_cast %406 : vector<1x3x14xf32> to vector<3x14xf32>
    %408 = vector.extract_strided_slice %397 {offsets = [2, 0, 1], sizes = [1, 3, 14], strides = [1, 1, 1]} : vector<3x3x16xf32> to vector<1x3x14xf32>
    %409 = vector.shape_cast %408 : vector<1x3x14xf32> to vector<3x14xf32>
    %410 = vector.extract_strided_slice %397 {offsets = [0, 0, 2], sizes = [1, 3, 14], strides = [1, 1, 1]} : vector<3x3x16xf32> to vector<1x3x14xf32>
    %411 = vector.shape_cast %410 : vector<1x3x14xf32> to vector<3x14xf32>
    %412 = vector.extract_strided_slice %397 {offsets = [1, 0, 2], sizes = [1, 3, 14], strides = [1, 1, 1]} : vector<3x3x16xf32> to vector<1x3x14xf32>
    %413 = vector.shape_cast %412 : vector<1x3x14xf32> to vector<3x14xf32>
    %414 = vector.extract_strided_slice %397 {offsets = [2, 0, 2], sizes = [1, 3, 14], strides = [1, 1, 1]} : vector<3x3x16xf32> to vector<1x3x14xf32>
    %415 = vector.shape_cast %414 : vector<1x3x14xf32> to vector<3x14xf32>
    %416 = tpu.concatenate %399, %401, %403, %405, %407, %409, %411, %413, %415 in 0 : vector<3x14xf32>, vector<3x14xf32>, vector<3x14xf32>, vector<3x14xf32>, vector<3x14xf32>, vector<3x14xf32>, vector<3x14xf32>, vector<3x14xf32>, vector<3x14xf32> -> vector<27x14xf32>
    %cst_111 = arith.constant dense<0.000000e+00> : vector<32x14xf32>
    %417 = tpu.matmul %0, %416, %cst_111 {dimension_numbers = #tpu.dot_dimension_numbers<[1], [0], [0], [1], [0, 0, 1, 1], [], []>} : vector<32x27xf32>, vector<27x14xf32>, vector<32x14xf32> -> vector<32x14xf32>
    %418 = vector.broadcast %1 : vector<32x1xf32> to vector<32x14xf32>
    %419 = arith.addf %417, %418 : vector<32x14xf32>
    %c0_112 = arith.constant 0 : index
    %c13 = arith.constant 13 : index
    %c0_113 = arith.constant 0 : index
    %c0_114 = arith.constant 0 : index
    %420 = vector.load %arg5[%c0_112, %c13, %c0_113, %c0_114] : memref<1x14x32x14xf32, #tpu.memory_space<vmem>>, vector<1x1x32x14xf32>
    %421 = vector.shape_cast %420 : vector<1x1x32x14xf32> to vector<32x14xf32>
    %422 = vector.shape_cast %419 : vector<32x14xf32> to vector<1x1x32x14xf32>
    tpu.vector_store %arg5[%c0_112, %c13, %c0_113, %c0_114], %422 {strides = array<i32>} : memref<1x14x32x14xf32, #tpu.memory_space<vmem>>, vector<1x1x32x14xf32>,
    return
  }
  func.func @transform_0(%arg0: i32, %arg1: i32) -> (i32, i32, i32, i32) {
    %c0_i32 = arith.constant 0 : i32
    %c0_i32_0 = arith.constant 0 : i32
    %c0_i32_1 = arith.constant 0 : i32
    %c0_i32_2 = arith.constant 0 : i32
    return %arg0, %c0_i32, %c0_i32_0, %c0_i32_1 : i32, i32, i32, i32
  }
  func.func @transform_1(%arg0: i32, %arg1: i32) -> (i32, i32) {
    %c0_i32 = arith.constant 0 : i32
    %c0_i32_0 = arith.constant 0 : i32
    %c0_i32_1 = arith.constant 0 : i32
    return %c0_i32, %c0_i32_0 : i32, i32
  }
  func.func @transform_2(%arg0: i32, %arg1: i32) -> (i32, i32) {
    %c0_i32 = arith.constant 0 : i32
    %c0_i32_0 = arith.constant 0 : i32
    %c0_i32_1 = arith.constant 0 : i32
    return %c0_i32, %c0_i32_0 : i32, i32
  }
  func.func @transform_3(%arg0: i32, %arg1: i32) -> (i32, i32, i32, i32) {
    %c0_i32 = arith.constant 0 : i32
    %c0_i32_0 = arith.constant 0 : i32
    %c0_i32_1 = arith.constant 0 : i32
    return %arg0, %arg1, %c0_i32, %c0_i32_0 : i32, i32, i32, i32
  }
}

</mosaic_0001>

<llo_original>
// kernel: fool_conv_module.1
$region0: #{fool_conv_module.1}
  #allocation0 [shape = 'u32[]', space=smem, size = 0x4, offset = 0x4, fixed_abs, tag = 'smem constant byte address 0x4 - core index']
  #allocation1 [shape = 'u32[144,128]{1,0:T(1,128)}', space=vmem, size = 0x12000, scoped, tag = 'internal scratch']
  %s0 = inlined_call_operand.vmem [shape: f32[2,3,16,16], index: 0, kind: input, shape index: {}]
  %s1 = inlined_call_operand.vmem [shape: f32[32,27], index: 1, kind: input, shape index: {}]
  %s2 = inlined_call_operand.vmem [shape: f32[32,1], index: 2, kind: input, shape index: {}]
  %s3 = inlined_call_operand.vmem [shape: f32[2,14,32,14], index: 3, kind: output, shape index: {}]
  %s4 = sld [smem:[#allocation0]]
  $region45: #{fool_conv_module.1} parent=0
    _
  %s6 = ssub.s32 1, %s4
  %s7 = scalar_select 0, %s6, %s4
  loop: start=0, step=1, limit=4
  $region2: #{fool_conv_module.1} parent=0 // loop_pre_header
    _
  $region3: #{fool_conv_module.1} parent=0 // loop_header
    %s9 = sphi 0, %s13
    %p10 = scmp.ge.s32.totalorder %s9, 4
    %s16 = sphi 0, %s28
    %s17 = sphi 0, %s24
    %s18 = sphi 0, %s16
    %s19 = sphi 0, %s17
    %s20 = sphi 0, %s18
    %s21 = sphi 0, %s19
    %s31 = sphi 0, %s33
    %s34 = sphi 0, %s31
    %s35 = sphi 0, %s34
    %s51 = sphi 0, %s35
    %s55 = sphi 0, %s55
    %s57 = sphi 0, %s55
    %s58 = sphi 0, %s57
    %s72 = sphi 0, %s58
    %s76 = sphi 0, %s76
    %s78 = sphi 0, %s76
    %s79 = sphi 0, %s78
    %s93 = sphi 0, %s79
    %s101 = sphi 0, %s103
    %s104 = sphi 0, %s101
    %s105 = sphi 0, %s104
    %s121 = sphi 0, %s105
  $region4: #{fool_conv_module.1} parent=0 // loop_header_branch
    %12 = sbr.rel (%p10) target = $region8
  $region5: #{fool_conv_module.1} parent=0 // loop_body
    %s14 = ssub.s32 %s9, 1
    %s15 = ssub.s32 %s9, 2
    %s22 = sadd.s32 1, %s17
    %p23 = scmp.ge.s32.totalorder %s22, 1
    %s24 = scalar_select %p23, 0, %s22
    %s25 = sadd.s32 1, %s16
    %s26 = scalar_select %p23, %s25, %s16
    %p27 = scmp.ge.s32.totalorder %s26, 2
    %s28 = scalar_select %p27, 0, %s26
    %s29 = ssub.s32 %s16, %s28
    %p30 = scmp.eq.s32.totalorder %s29, 0
    %s32 = sadd.s32 %s31, 1
    %s33 = scalar_select %p30, %s31, %s32
    %p36 = pneg %p30
    %p37 = scmp.eq.s32.totalorder %s9, 1
    %p38 = por %p36, %p37
    %p39 = scmp.ne.s32.totalorder %s31, %s34
    %p40 = scmp.eq.s32.totalorder %s9, 0
    %p41 = por %p39, %p40
    %p42 = scmp.ne.s32.totalorder %s31, %s34
    %p43 = scmp.eq.s32.totalorder %s14, 1
    %p44 = por %p42, %p43
    %p45 = scmp.ne.s32.totalorder %s34, %s35
    %p46 = scmp.eq.s32.totalorder %s14, 0
    %p47 = por %p45, %p46
    %p48 = scmp.ne.s32.totalorder %s34, %s35
    %p49 = scmp.eq.s32.totalorder %s15, 1
    %p50 = por %p48, %p49
    %p52 = scmp.ne.s32.totalorder %s35, %s51
    %p53 = scmp.eq.s32.totalorder %s15, 0
    %p54 = por %p52, %p53
    %s56 = sadd.s32 %s55, 1
    %p59 = scmp.eq.s32.totalorder %s9, 1
    %p60 = scmp.ne.s32.totalorder %s55, %s57
    %p61 = scmp.eq.s32.totalorder %s9, 0
    %p62 = por %p60, %p61
    %p63 = scmp.ne.s32.totalorder %s55, %s57
    %p64 = scmp.eq.s32.totalorder %s14, 1
    %p65 = por %p63, %p64
    %p66 = scmp.ne.s32.totalorder %s57, %s58
    %p67 = scmp.eq.s32.totalorder %s14, 0
    %p68 = por %p66, %p67
    %p69 = scmp.ne.s32.totalorder %s57, %s58
    %p70 = scmp.eq.s32.totalorder %s15, 1
    %p71 = por %p69, %p70
    %p73 = scmp.ne.s32.totalorder %s58, %s72
    %p74 = scmp.eq.s32.totalorder %s15, 0
    %p75 = por %p73, %p74
    %s77 = sadd.s32 %s76, 1
    %p80 = scmp.eq.s32.totalorder %s9, 1
    %p81 = scmp.ne.s32.totalorder %s76, %s78
    %p82 = scmp.eq.s32.totalorder %s9, 0
    %p83 = por %p81, %p82
    %p84 = scmp.ne.s32.totalorder %s76, %s78
    %p85 = scmp.eq.s32.totalorder %s14, 1
    %p86 = por %p84, %p85
    %p87 = scmp.ne.s32.totalorder %s78, %s79
    %p88 = scmp.eq.s32.totalorder %s14, 0
    %p89 = por %p87, %p88
    %p90 = scmp.ne.s32.totalorder %s78, %s79
    %p91 = scmp.eq.s32.totalorder %s15, 1
    %p92 = por %p90, %p91
    %p94 = scmp.ne.s32.totalorder %s79, %s93
    %p95 = scmp.eq.s32.totalorder %s15, 0
    %p96 = por %p94, %p95
    %s97 = ssub.s32 %s16, %s28
    %s98 = ssub.s32 %s17, %s24
    %s99 = sor.u32 %s97, %s98
    %p100 = scmp.eq.s32.totalorder %s99, 0
    %s102 = sadd.s32 %s101, 1
    %s103 = scalar_select %p100, %s101, %s102
    %p106 = pneg %p100
    %p107 = scmp.eq.s32.totalorder %s9, 1
    %p108 = por %p106, %p107
    %p109 = scmp.ne.s32.totalorder %s101, %s104
    %p110 = scmp.eq.s32.totalorder %s9, 0
    %p111 = por %p109, %p110
    %p112 = scmp.ne.s32.totalorder %s101, %s104
    %p113 = scmp.eq.s32.totalorder %s14, 1
    %p114 = por %p112, %p113
    %p115 = scmp.ne.s32.totalorder %s104, %s105
    %p116 = scmp.eq.s32.totalorder %s14, 0
    %p117 = por %p115, %p116
    %p118 = scmp.ne.s32.totalorder %s104, %s105
    %p119 = scmp.eq.s32.totalorder %s15, 1
    %p120 = por %p118, %p119
    %p122 = scmp.ne.s32.totalorder %s105, %s121
    %p123 = scmp.eq.s32.totalorder %s15, 0
    %p124 = por %p122, %p123
    %p125 = scmp.le.s32.totalorder 1, %s9
    %p126 = scmp.lt.s32.totalorder %s9, 3
    %p127 = pnand %p125, %p126
    %p128 = pneg %p127
    // Predicated region
    $region9: #{fool_conv_module.1} parent=5 // pred_check
      _
    $region10: #{fool_conv_module.1} parent=5 // pred_check_branch
      %130 = sbr.rel (%p127) target = $region12
    $region11: #{fool_conv_module.1} parent=5 // pred_region
      %s131 = ssub.s32 %s9, 1
      // Predicated region
      $region13: #{fool_conv_module.1} parent=11 // pred_check
        %p132 = pneg %p68
      $region14: #{fool_conv_module.1} parent=11 // pred_check_branch
        %134 = sbr.rel (%p132) target = $region16
      $region15: #{fool_conv_module.1} parent=11 // pred_region
        _
      $region16: #{fool_conv_module.1} parent=11 // pred_fallthru
        _
      // Predicated region
      $region17: #{fool_conv_module.1} parent=11 // pred_check
        %p135 = pneg %p89
      $region18: #{fool_conv_module.1} parent=11 // pred_check_branch
        %137 = sbr.rel (%p135) target = $region20
      $region19: #{fool_conv_module.1} parent=11 // pred_region
        _
      $region20: #{fool_conv_module.1} parent=11 // pred_fallthru
        _
    $region12: #{fool_conv_module.1} parent=5 // pred_fallthru
      _
    %p138 = scmp.lt.s32.totalorder %s9, 2
    // Predicated region
    $region21: #{fool_conv_module.1} parent=5 // pred_check
      %p139 = pneg %p138
    $region22: #{fool_conv_module.1} parent=5 // pred_check_branch
      %141 = sbr.rel (%p139) target = $region24
    $region23: #{fool_conv_module.1} parent=5 // pred_region
      // Predicated region
      $region25: #{fool_conv_module.1} parent=23 // pred_check
        %p142 = pneg %p41
      $region26: #{fool_conv_module.1} parent=23 // pred_check_branch
        %144 = sbr.rel (%p142) target = $region28
      $region27: #{fool_conv_module.1} parent=23 // pred_region
        %p145 = scmp.lt.s32.totalorder %s16, 1
        %s146 = scalar_select %p145, %s16, 1
        %s147 = smul.addr %s146, 6
        %s148 = smul.addr %s147, 8
        %s149 = scalar_lea.vmem %s0, %s148
      $region28: #{fool_conv_module.1} parent=23 // pred_fallthru
        _
    $region24: #{fool_conv_module.1} parent=5 // pred_fallthru
      _
    %p150 = scmp.le.s32.totalorder 1, %s9
    %p151 = scmp.lt.s32.totalorder %s9, 3
    %p152 = pnand %p150, %p151
    %p153 = pneg %p152
    // Predicated region
    $region29: #{fool_conv_module.1} parent=5 // pred_check
      _
    $region30: #{fool_conv_module.1} parent=5 // pred_check_branch
      %155 = sbr.rel (%p152) target = $region32
    $region31: #{fool_conv_module.1} parent=5 // pred_region
      %s156 = ssub.s32 %s9, 1
      %p157 = scmp.lt.s32.totalorder %s18, 1
      %s158 = scalar_select %p157, %s18, 1
      %s159 = smul.addr %s158, 6
      %s160 = smul.addr %s159, 8
      %s161 = scalar_lea.vmem %s0, %s160
      %p162 = pneg %p47
      %p163 = pneg %p44
      %p164 = pneg %p68
      %p165 = pneg %p65
      %p166 = pneg %p89
      %p167 = pneg %p86
      %p168 = pneg %p117
      %p169 = pneg %p114
      %s170 = smul.u32 14, %s19
      %p171 = scmp.lt.s32.totalorder %s18, 1
      %s172 = scalar_select %p171, %s18, 1
      %p173 = scmp.lt.s32.totalorder %s170, 13
      %s174 = scalar_select %p173, %s170, 13
      %s175 = smul.addr %s174, 4
      %s176 = smul.addr %s172, 56
      %s177 = sadd.s32 %s175, %s176
      %s178 = smul.addr %s177, 8
      %s179 = scalar_lea.vmem %s3, %s178
      %p180 = scmp.lt.s32.totalorder %s18, 1
      %s181 = scalar_select %p180, %s18, 1
      %s182 = smul.addr %s181, 6
      %s183 = smul.addr %s182, 8
      %s184 = scalar_lea.vmem %s0, %s183
      %s185 = smul.u32 14, %s19
      %p186 = scmp.lt.s32.totalorder %s18, 1
      %s187 = scalar_select %p186, %s18, 1
      %p188 = scmp.lt.s32.totalorder %s185, 13
      %s189 = scalar_select %p188, %s185, 13
      %s190 = smul.addr %s189, 4
      %s191 = smul.addr %s187, 56
      %s192 = sadd.s32 %s190, %s191
      %s193 = smul.addr %s192, 8
      %s194 = scalar_lea.vmem %s3, %s193
      %s195 = smul.u32 14, %s19
      %v196 = vld [vmem:[%s1] sm:$0xff]
      %v197 = vld [vmem:[%s1 + $0x8] sm:$0xff]
      %v198 = vld [vmem:[%s1 + $0x10] sm:$0xff]
      %v199 = vld [vmem:[%s1 + $0x18] sm:$0xff]
      %v200 = vld [vmem:[%s2] sm:$0xff]
      %v201 = vld [vmem:[%s2 + $0x8] sm:$0xff]
      %v202 = vld [vmem:[%s2 + $0x10] sm:$0xff]
      %v203 = vld [vmem:[%s2 + $0x18] sm:$0xff]
      %s204 = smul.u32 %s19, 14
      %p205 = scmp.lt.s32.totalorder %s204, 13
      %s206 = scalar_select %p205, %s204, 13
      %s207 = scalar_lea.vmem %s184, %s206
      %v208 = vld [vmem:[%s207] sm:$0x7]
      %v209 = vld [vmem:[%s207 + $0x10] sm:$0x7]
      %v210 = vld [vmem:[%s207 + $0x20] sm:$0x7]
      %v212 = vrot.slane %v209, 5
      %v215 = vrot.slane %v210, 2
      %v218 = vrot.slane %v208, 7
      %219 = vrot.lane.b32.xlu0 %v218, 127
      %v220 = vpop.permute.xlu0 %219
      %v222 = vrot.slane %v209, 4
      %223 = vrot.lane.b32.xlu0 %v222, 127
      %v224 = vpop.permute.xlu0 %223
      %v226 = vrot.slane %v210, 1
      %227 = vrot.lane.b32.xlu0 %v226, 127
      %v228 = vpop.permute.xlu0 %227
      %v230 = vrot.slane %v208, 6
      %231 = vrot.lane.b32.xlu0 %v230, 126
      %v232 = vpop.permute.xlu0 %231
      %v234 = vrot.slane %v209, 3
      %235 = vrot.lane.b32.xlu0 %v234, 126
      %v236 = vpop.permute.xlu0 %235
      %238 = vrot.lane.b32.xlu0 %v210, 126
      %v239 = vpop.permute.xlu0 %238
      %vm240 = vcmask 1042432
      %v241 = vsel %vm240, %v208, %v212
      %vm242 = vcmask 1045504
      %v243 = vsel %vm242, %v241, %v215
      %vm244 = vcmask 1040384
      %v245 = vsel %vm244, %v215, %v220
      %vm246 = vcmask 1043456
      %v247 = vsel %vm246, %v245, %v224
      %vm248 = vcmask 1046528
      %v249 = vsel %vm248, %v247, %v228
      %vm250 = vcmask 1041408
      %v251 = vsel %vm250, %v228, %v232
      %vm252 = vcmask 1044480
      %v253 = vsel %vm252, %v251, %v236
      %255 = vset.pattern.permute.xlu0 0
      %256 = vperm.xlu0 %255, %v200
      %v257 = vpop.permute.xlu0 %256
      %260 = vset.pattern.permute.xlu0 0
      %261 = vperm.xlu0 %260, %v201
      %v262 = vpop.permute.xlu0 %261
      %265 = vset.pattern.permute.xlu0 0
      %266 = vperm.xlu0 %265, %v202
      %v267 = vpop.permute.xlu0 %266
      %270 = vset.pattern.permute.xlu0 0
      %271 = vperm.xlu0 %270, %v203
      %v272 = vpop.permute.xlu0 %271
      %vm274 = vcmask 220160
      %v276 = vsel %vm274, %v196, 0
      %v279 = vsel %vm274, %v197, 0
      %v282 = vsel %vm274, %v198, 0
      %v285 = vsel %vm274, %v199, 0
      %v287 = vsel %vm240, %v239, 0
      %289 = vmatprep.subr.mxu0 0.0
      %290 = vmatpush1.msra.mxu0 0.0
      %291 = vmatprep.subr.mxu0 0.0
      %292 = vmatpush1.msra.mxu0 0.0
      %293 = vmatprep.subr.mxu0 0.0
      %294 = vmatpush1.msra.mxu0 0.0
      %295 = vmatprep.subr.mxu0 0.0
      %296 = vmatpush1.msra.mxu0 0.0
      %297 = vmatprep.subr.mxu0 0.0
      %298 = vmatpush1.msra.mxu0 0.0
      %299 = vmatprep.subr.mxu0 0.0
      %300 = vmatpush1.msra.mxu0 0.0
      %301 = vmatprep.subr.mxu0 0.0
      %302 = vmatpush1.msra.mxu0 0.0
      %303 = vmatprep.subr.mxu0 0.0
      %304 = vmatpush1.msra.mxu0 0.0
      %305 = vmatprep.subr.mxu0 0.0
      %306 = vmatpush1.msra.mxu0 0.0
      %307 = vmatprep.subr.mxu0 0.0
      %308 = vmatpush1.msra.mxu0 0.0
      %309 = vmatprep.subr.mxu0 0.0
      %310 = vmatpush1.msra.mxu0 0.0
      %311 = vmatprep.subr.mxu0 0.0
      %312 = vmatpush1.msra.mxu0 0.0
      %313 = vmatprep.subr.mxu0 0.0
      %314 = vmatpush1.msra.mxu0 %v287
      %315 = vmatprep.subr.mxu0 0.0
      %316 = vmatpush1.msra.mxu0 %v253
      %317 = vmatprep.subr.mxu0 0.0
      %318 = vmatpush1.msra.mxu0 %v249
      %319 = vmatprep.subr.mxu0 0.0
      %320 = vmatpush1.msra.mxu0 %v243
      %321 = vmatprep.subr.mxu0 0.0
      %322 = vmatpush2.msra.mxu0 0.0
      %323 = vmatprep.subr.mxu0 0.0
      %324 = vmatpush2.msra.mxu0 0.0
      %325 = vmatprep.subr.mxu0 0.0
      %326 = vmatpush2.msra.mxu0 0.0
      %327 = vmatprep.subr.mxu0 0.0
      %328 = vmatpush2.msra.mxu0 0.0
      %329 = vmatprep.subr.mxu0 0.0
      %330 = vmatpush2.msra.mxu0 0.0
      %331 = vmatprep.subr.mxu0 0.0
      %332 = vmatpush2.msra.mxu0 0.0
      %333 = vmatprep.subr.mxu0 0.0
      %334 = vmatpush2.msra.mxu0 0.0
      %335 = vmatprep.subr.mxu0 0.0
      %336 = vmatpush2.msra.mxu0 0.0
      %337 = vmatprep.subr.mxu0 0.0
      %338 = vmatpush2.msra.mxu0 0.0
      %339 = vmatprep.subr.mxu0 0.0
      %340 = vmatpush2.msra.mxu0 0.0
      %341 = vmatprep.subr.mxu0 0.0
      %342 = vmatpush2.msra.mxu0 0.0
      %343 = vmatprep.subr.mxu0 0.0
      %344 = vmatpush2.msra.mxu0 0.0
      %345 = vmatprep.subr.mxu0 0.0
      %346 = vmatpush2.msra.mxu0 0.0
      %347 = vmatprep.subr.mxu0 0.0
      %348 = vmatpush2.msra.mxu0 0.0
      %349 = vmatprep.subr.mxu0 0.0
      %350 = vmatpush2.msra.mxu0 0.0
      %351 = vmatprep.subr.mxu0 0.0
      %352 = vmatpush2.msra.mxu0 0.0
      %353 = vmatprep.mubr.f32.mxu0 0.0
      %354 = vmatmul.mubr.f32.gmra.mxu0 %v276
      %v355 = vpop.f32.mrf.mxu0
      %v356 = vadd.f32 %v257, %v355
      %v357 = vpop.f32.mrf.mxu0
      %358 = vmatprep.mubr.f32.mxu0 0.0
      %359 = vmatmul.mubr.f32.gmra.mxu0 %v279
      %v360 = vpop.f32.mrf.mxu0
      %v361 = vadd.f32 %v262, %v360
      %v362 = vpop.f32.mrf.mxu0
      %363 = vmatprep.mubr.f32.mxu0 0.0
      %364 = vmatmul.mubr.f32.gmra.mxu0 %v282
      %v365 = vpop.f32.mrf.mxu0
      %v366 = vadd.f32 %v267, %v365
      %v367 = vpop.f32.mrf.mxu0
      %368 = vmatprep.mubr.f32.mxu0 0.0
      %369 = vmatmul.mubr.f32.gmra.mxu0 %v285
      %v370 = vpop.f32.mrf.mxu0
      %v371 = vadd.f32 %v272, %v370
      %v372 = vpop.f32.mrf.mxu0
      %373 = vdwg.mxu0
      %vm374 = vcmask 113664
      %375 = vst.msk [vmem:[%s194] sm:$0xff] %vm374, %v356
      %376 = vst.msk [vmem:[%s194 + $0x8] sm:$0xff] %vm374, %v361
      %377 = vst.msk [vmem:[%s194 + $0x10] sm:$0xff] %vm374, %v366
      %378 = vst.msk [vmem:[%s194 + $0x18] sm:$0xff] %vm374, %v371
      %s379 = sadd.s32 %s204, 1
      %p380 = scmp.lt.s32.totalorder %s379, 13
      %s381 = scalar_select %p380, %s379, 13
      %s382 = scalar_lea.vmem %s184, %s381
      %v383 = vld [vmem:[%s382] sm:$0x7]
      %v384 = vld [vmem:[%s382 + $0x10] sm:$0x7]
      %v385 = vld [vmem:[%s382 + $0x20] sm:$0x7]
      %v387 = vrot.slane %v384, 5
      %v390 = vrot.slane %v385, 2
      %v393 = vrot.slane %v383, 7
      %394 = vrot.lane.b32.xlu0 %v393, 127
      %v395 = vpop.permute.xlu0 %394
      %v397 = vrot.slane %v384, 4
      %398 = vrot.lane.b32.xlu0 %v397, 127
      %v399 = vpop.permute.xlu0 %398
      %v401 = vrot.slane %v385, 1
      %402 = vrot.lane.b32.xlu0 %v401, 127
      %v403 = vpop.permute.xlu0 %402
      %v405 = vrot.slane %v383, 6
      %406 = vrot.lane.b32.xlu0 %v405, 126
      %v407 = vpop.permute.xlu0 %406
      %v409 = vrot.slane %v384, 3
      %410 = vrot.lane.b32.xlu0 %v409, 126
      %v411 = vpop.permute.xlu0 %410
      %413 = vrot.lane.b32.xlu0 %v385, 126
      %v414 = vpop.permute.xlu0 %413
      %v415 = vsel %vm240, %v383, %v387
      %v416 = vsel %vm242, %v415, %v390
      %v417 = vsel %vm244, %v390, %v395
      %v418 = vsel %vm246, %v417, %v399
      %v419 = vsel %vm248, %v418, %v403
      %v420 = vsel %vm250, %v403, %v407
      %v421 = vsel %vm252, %v420, %v411
      %v422 = vsel %vm240, %v414, 0
      %424 = vmatprep.subr.mxu0 0.0
      %425 = vmatpush1.msra.mxu0 0.0
      %426 = vmatprep.subr.mxu0 0.0
      %427 = vmatpush1.msra.mxu0 0.0
      %428 = vmatprep.subr.mxu0 0.0
      %429 = vmatpush1.msra.mxu0 0.0
      %430 = vmatprep.subr.mxu0 0.0
      %431 = vmatpush1.msra.mxu0 0.0
      %432 = vmatprep.subr.mxu0 0.0
      %433 = vmatpush1.msra.mxu0 0.0
      %434 = vmatprep.subr.mxu0 0.0
      %435 = vmatpush1.msra.mxu0 0.0
      %436 = vmatprep.subr.mxu0 0.0
      %437 = vmatpush1.msra.mxu0 0.0
      %438 = vmatprep.subr.mxu0 0.0
      %439 = vmatpush1.msra.mxu0 0.0
      %440 = vmatprep.subr.mxu0 0.0
      %441 = vmatpush1.msra.mxu0 0.0
      %442 = vmatprep.subr.mxu0 0.0
      %443 = vmatpush1.msra.mxu0 0.0
      %444 = vmatprep.subr.mxu0 0.0
      %445 = vmatpush1.msra.mxu0 0.0
      %446 = vmatprep.subr.mxu0 0.0
      %447 = vmatpush1.msra.mxu0 0.0
      %448 = vmatprep.subr.mxu0 0.0
      %449 = vmatpush1.msra.mxu0 %v422
      %450 = vmatprep.subr.mxu0 0.0
      %451 = vmatpush1.msra.mxu0 %v421
      %452 = vmatprep.subr.mxu0 0.0
      %453 = vmatpush1.msra.mxu0 %v419
      %454 = vmatprep.subr.mxu0 0.0
      %455 = vmatpush1.msra.mxu0 %v416
      %456 = vmatprep.subr.mxu0 0.0
      %457 = vmatpush2.msra.mxu0 0.0
      %458 = vmatprep.subr.mxu0 0.0
      %459 = vmatpush2.msra.mxu0 0.0
      %460 = vmatprep.subr.mxu0 0.0
      %461 = vmatpush2.msra.mxu0 0.0
      %462 = vmatprep.subr.mxu0 0.0
      %463 = vmatpush2.msra.mxu0 0.0
      %464 = vmatprep.subr.mxu0 0.0
      %465 = vmatpush2.msra.mxu0 0.0
      %466 = vmatprep.subr.mxu0 0.0
      %467 = vmatpush2.msra.mxu0 0.0
      %468 = vmatprep.subr.mxu0 0.0
      %469 = vmatpush2.msra.mxu0 0.0
      %470 = vmatprep.subr.mxu0 0.0
      %471 = vmatpush2.msra.mxu0 0.0
      %472 = vmatprep.subr.mxu0 0.0
      %473 = vmatpush2.msra.mxu0 0.0
      %474 = vmatprep.subr.mxu0 0.0
      %475 = vmatpush2.msra.mxu0 0.0
      %476 = vmatprep.subr.mxu0 0.0
      %477 = vmatpush2.msra.mxu0 0.0
      %478 = vmatprep.subr.mxu0 0.0
      %479 = vmatpush2.msra.mxu0 0.0
      %480 = vmatprep.subr.mxu0 0.0
      %481 = vmatpush2.msra.mxu0 0.0
      %482 = vmatprep.subr.mxu0 0.0
      %483 = vmatpush2.msra.mxu0 0.0
      %484 = vmatprep.subr.mxu0 0.0
      %485 = vmatpush2.msra.mxu0 0.0
      %486 = vmatprep.subr.mxu0 0.0
      %487 = vmatpush2.msra.mxu0 0.0
      %488 = vmatprep.mubr.f32.mxu0 0.0
      %489 = vmatmul.mubr.f32.gmra.mxu0 %v276
      %v490 = vpop.f32.mrf.mxu0
      %v491 = vadd.f32 %v257, %v490
      %v492 = vpop.f32.mrf.mxu0
      %493 = vmatprep.mubr.f32.mxu0 0.0
      %494 = vmatmul.mubr.f32.gmra.mxu0 %v279
      %v495 = vpop.f32.mrf.mxu0
      %v496 = vadd.f32 %v262, %v495
      %v497 = vpop.f32.mrf.mxu0
      %498 = vmatprep.mubr.f32.mxu0 0.0
      %499 = vmatmul.mubr.f32.gmra.mxu0 %v282
      %v500 = vpop.f32.mrf.mxu0
      %v501 = vadd.f32 %v267, %v500
      %v502 = vpop.f32.mrf.mxu0
      %503 = vmatprep.mubr.f32.mxu0 0.0
      %504 = vmatmul.mubr.f32.gmra.mxu0 %v285
      %v505 = vpop.f32.mrf.mxu0
      %v506 = vadd.f32 %v272, %v505
      %v507 = vpop.f32.mrf.mxu0
      %508 = vdwg.mxu0
      %s509 = scalar_lea.vmem %s194, 32
      %510 = vst.msk [vmem:[%s509] sm:$0xff] %vm374, %v491
      %511 = vst.msk [vmem:[%s509 + $0x8] sm:$0xff] %vm374, %v496
      %512 = vst.msk [vmem:[%s509 + $0x10] sm:$0xff] %vm374, %v501
      %513 = vst.msk [vmem:[%s509 + $0x18] sm:$0xff] %vm374, %v506
      %s514 = sadd.s32 %s204, 2
      %p515 = scmp.lt.s32.totalorder %s514, 13
      %s516 = scalar_select %p515, %s514, 13
      %s517 = scalar_lea.vmem %s184, %s516
      %v518 = vld [vmem:[%s517] sm:$0x7]
      %v519 = vld [vmem:[%s517 + $0x10] sm:$0x7]
      %v520 = vld [vmem:[%s517 + $0x20] sm:$0x7]
      %v522 = vrot.slane %v519, 5
      %v525 = vrot.slane %v520, 2
      %v528 = vrot.slane %v518, 7
      %529 = vrot.lane.b32.xlu0 %v528, 127
      %v530 = vpop.permute.xlu0 %529
      %v532 = vrot.slane %v519, 4
      %533 = vrot.lane.b32.xlu0 %v532, 127
      %v534 = vpop.permute.xlu0 %533
      %v536 = vrot.slane %v520, 1
      %537 = vrot.lane.b32.xlu0 %v536, 127
      %v538 = vpop.permute.xlu0 %537
      %v540 = vrot.slane %v518, 6
      %541 = vrot.lane.b32.xlu0 %v540, 126
      %v542 = vpop.permute.xlu0 %541
      %v544 = vrot.slane %v519, 3
      %545 = vrot.lane.b32.xlu0 %v544, 126
      %v546 = vpop.permute.xlu0 %545
      %548 = vrot.lane.b32.xlu0 %v520, 126
      %v549 = vpop.permute.xlu0 %548
      %v550 = vsel %vm240, %v518, %v522
      %v551 = vsel %vm242, %v550, %v525
      %v552 = vsel %vm244, %v525, %v530
      %v553 = vsel %vm246, %v552, %v534
      %v554 = vsel %vm248, %v553, %v538
      %v555 = vsel %vm250, %v538, %v542
      %v556 = vsel %vm252, %v555, %v546
      %v557 = vsel %vm240, %v549, 0
      %559 = vmatprep.subr.mxu0 0.0
      %560 = vmatpush1.msra.mxu0 0.0
      %561 = vmatprep.subr.mxu0 0.0
      %562 = vmatpush1.msra.mxu0 0.0
      %563 = vmatprep.subr.mxu0 0.0
      %564 = vmatpush1.msra.mxu0 0.0
      %565 = vmatprep.subr.mxu0 0.0
      %566 = vmatpush1.msra.mxu0 0.0
      %567 = vmatprep.subr.mxu0 0.0
      %568 = vmatpush1.msra.mxu0 0.0
      %569 = vmatprep.subr.mxu0 0.0
      %570 = vmatpush1.msra.mxu0 0.0
      %571 = vmatprep.subr.mxu0 0.0
      %572 = vmatpush1.msra.mxu0 0.0
      %573 = vmatprep.subr.mxu0 0.0
      %574 = vmatpush1.msra.mxu0 0.0
      %575 = vmatprep.subr.mxu0 0.0
      %576 = vmatpush1.msra.mxu0 0.0
      %577 = vmatprep.subr.mxu0 0.0
      %578 = vmatpush1.msra.mxu0 0.0
      %579 = vmatprep.subr.mxu0 0.0
      %580 = vmatpush1.msra.mxu0 0.0
      %581 = vmatprep.subr.mxu0 0.0
      %582 = vmatpush1.msra.mxu0 0.0
      %583 = vmatprep.subr.mxu0 0.0
      %584 = vmatpush1.msra.mxu0 %v557
      %585 = vmatprep.subr.mxu0 0.0
      %586 = vmatpush1.msra.mxu0 %v556
      %587 = vmatprep.subr.mxu0 0.0
      %588 = vmatpush1.msra.mxu0 %v554
      %589 = vmatprep.subr.mxu0 0.0
      %590 = vmatpush1.msra.mxu0 %v551
      %591 = vmatprep.subr.mxu0 0.0
      %592 = vmatpush2.msra.mxu0 0.0
      %593 = vmatprep.subr.mxu0 0.0
      %594 = vmatpush2.msra.mxu0 0.0
      %595 = vmatprep.subr.mxu0 0.0
      %596 = vmatpush2.msra.mxu0 0.0
      %597 = vmatprep.subr.mxu0 0.0
      %598 = vmatpush2.msra.mxu0 0.0
      %599 = vmatprep.subr.mxu0 0.0
      %600 = vmatpush2.msra.mxu0 0.0
      %601 = vmatprep.subr.mxu0 0.0
      %602 = vmatpush2.msra.mxu0 0.0
      %603 = vmatprep.subr.mxu0 0.0
      %604 = vmatpush2.msra.mxu0 0.0
      %605 = vmatprep.subr.mxu0 0.0
      %606 = vmatpush2.msra.mxu0 0.0
      %607 = vmatprep.subr.mxu0 0.0
      %608 = vmatpush2.msra.mxu0 0.0
      %609 = vmatprep.subr.mxu0 0.0
      %610 = vmatpush2.msra.mxu0 0.0
      %611 = vmatprep.subr.mxu0 0.0
      %612 = vmatpush2.msra.mxu0 0.0
      %613 = vmatprep.subr.mxu0 0.0
      %614 = vmatpush2.msra.mxu0 0.0
      %615 = vmatprep.subr.mxu0 0.0
      %616 = vmatpush2.msra.mxu0 0.0
      %617 = vmatprep.subr.mxu0 0.0
      %618 = vmatpush2.msra.mxu0 0.0
      %619 = vmatprep.subr.mxu0 0.0
      %620 = vmatpush2.msra.mxu0 0.0
      %621 = vmatprep.subr.mxu0 0.0
      %622 = vmatpush2.msra.mxu0 0.0
      %623 = vmatprep.mubr.f32.mxu0 0.0
      %624 = vmatmul.mubr.f32.gmra.mxu0 %v276
      %v625 = vpop.f32.mrf.mxu0
      %v626 = vadd.f32 %v257, %v625
      %v627 = vpop.f32.mrf.mxu0
      %628 = vmatprep.mubr.f32.mxu0 0.0
      %629 = vmatmul.mubr.f32.gmra.mxu0 %v279
      %v630 = vpop.f32.mrf.mxu0
      %v631 = vadd.f32 %v262, %v630
      %v632 = vpop.f32.mrf.mxu0
      %633 = vmatprep.mubr.f32.mxu0 0.0
      %634 = vmatmul.mubr.f32.gmra.mxu0 %v282
      %v635 = vpop.f32.mrf.mxu0
      %v636 = vadd.f32 %v267, %v635
      %v637 = vpop.f32.mrf.mxu0
      %638 = vmatprep.mubr.f32.mxu0 0.0
      %639 = vmatmul.mubr.f32.gmra.mxu0 %v285
      %v640 = vpop.f32.mrf.mxu0
      %v641 = vadd.f32 %v272, %v640
      %v642 = vpop.f32.mrf.mxu0
      %643 = vdwg.mxu0
      %s644 = scalar_lea.vmem %s194, 64
      %645 = vst.msk [vmem:[%s644] sm:$0xff] %vm374, %v626
      %646 = vst.msk [vmem:[%s644 + $0x8] sm:$0xff] %vm374, %v631
      %647 = vst.msk [vmem:[%s644 + $0x10] sm:$0xff] %vm374, %v636
      %648 = vst.msk [vmem:[%s644 + $0x18] sm:$0xff] %vm374, %v641
      %s649 = sadd.s32 %s204, 3
      %p650 = scmp.lt.s32.totalorder %s649, 13
      %s651 = scalar_select %p650, %s649, 13
      %s652 = scalar_lea.vmem %s184, %s651
      %v653 = vld [vmem:[%s652] sm:$0x7]
      %v654 = vld [vmem:[%s652 + $0x10] sm:$0x7]
      %v655 = vld [vmem:[%s652 + $0x20] sm:$0x7]
      %v657 = vrot.slane %v654, 5
      %v660 = vrot.slane %v655, 2
      %v663 = vrot.slane %v653, 7
      %664 = vrot.lane.b32.xlu0 %v663, 127
      %v665 = vpop.permute.xlu0 %664
      %v667 = vrot.slane %v654, 4
      %668 = vrot.lane.b32.xlu0 %v667, 127
      %v669 = vpop.permute.xlu0 %668
      %v671 = vrot.slane %v655, 1
      %672 = vrot.lane.b32.xlu0 %v671, 127
      %v673 = vpop.permute.xlu0 %672
      %v675 = vrot.slane %v653, 6
      %676 = vrot.lane.b32.xlu0 %v675, 126
      %v677 = vpop.permute.xlu0 %676
      %v679 = vrot.slane %v654, 3
      %680 = vrot.lane.b32.xlu0 %v679, 126
      %v681 = vpop.permute.xlu0 %680
      %683 = vrot.lane.b32.xlu0 %v655, 126
      %v684 = vpop.permute.xlu0 %683
      %v685 = vsel %vm240, %v653, %v657
      %v686 = vsel %vm242, %v685, %v660
      %v687 = vsel %vm244, %v660, %v665
      %v688 = vsel %vm246, %v687, %v669
      %v689 = vsel %vm248, %v688, %v673
      %v690 = vsel %vm250, %v673, %v677
      %v691 = vsel %vm252, %v690, %v681
      %v692 = vsel %vm240, %v684, 0
      %694 = vmatprep.subr.mxu0 0.0
      %695 = vmatpush1.msra.mxu0 0.0
      %696 = vmatprep.subr.mxu0 0.0
      %697 = vmatpush1.msra.mxu0 0.0
      %698 = vmatprep.subr.mxu0 0.0
      %699 = vmatpush1.msra.mxu0 0.0
      %700 = vmatprep.subr.mxu0 0.0
      %701 = vmatpush1.msra.mxu0 0.0
      %702 = vmatprep.subr.mxu0 0.0
      %703 = vmatpush1.msra.mxu0 0.0
      %704 = vmatprep.subr.mxu0 0.0
      %705 = vmatpush1.msra.mxu0 0.0
      %706 = vmatprep.subr.mxu0 0.0
      %707 = vmatpush1.msra.mxu0 0.0
      %708 = vmatprep.subr.mxu0 0.0
      %709 = vmatpush1.msra.mxu0 0.0
      %710 = vmatprep.subr.mxu0 0.0
      %711 = vmatpush1.msra.mxu0 0.0
      %712 = vmatprep.subr.mxu0 0.0
      %713 = vmatpush1.msra.mxu0 0.0
      %714 = vmatprep.subr.mxu0 0.0
      %715 = vmatpush1.msra.mxu0 0.0
      %716 = vmatprep.subr.mxu0 0.0
      %717 = vmatpush1.msra.mxu0 0.0
      %718 = vmatprep.subr.mxu0 0.0
      %719 = vmatpush1.msra.mxu0 %v692
      %720 = vmatprep.subr.mxu0 0.0
      %721 = vmatpush1.msra.mxu0 %v691
      %722 = vmatprep.subr.mxu0 0.0
      %723 = vmatpush1.msra.mxu0 %v689
      %724 = vmatprep.subr.mxu0 0.0
      %725 = vmatpush1.msra.mxu0 %v686
      %726 = vmatprep.subr.mxu0 0.0
      %727 = vmatpush2.msra.mxu0 0.0
      %728 = vmatprep.subr.mxu0 0.0
      %729 = vmatpush2.msra.mxu0 0.0
      %730 = vmatprep.subr.mxu0 0.0
      %731 = vmatpush2.msra.mxu0 0.0
      %732 = vmatprep.subr.mxu0 0.0
      %733 = vmatpush2.msra.mxu0 0.0
      %734 = vmatprep.subr.mxu0 0.0
      %735 = vmatpush2.msra.mxu0 0.0
      %736 = vmatprep.subr.mxu0 0.0
      %737 = vmatpush2.msra.mxu0 0.0
      %738 = vmatprep.subr.mxu0 0.0
      %739 = vmatpush2.msra.mxu0 0.0
      %740 = vmatprep.subr.mxu0 0.0
      %741 = vmatpush2.msra.mxu0 0.0
      %742 = vmatprep.subr.mxu0 0.0
      %743 = vmatpush2.msra.mxu0 0.0
      %744 = vmatprep.subr.mxu0 0.0
      %745 = vmatpush2.msra.mxu0 0.0
      %746 = vmatprep.subr.mxu0 0.0
      %747 = vmatpush2.msra.mxu0 0.0
      %748 = vmatprep.subr.mxu0 0.0
      %749 = vmatpush2.msra.mxu0 0.0
      %750 = vmatprep.subr.mxu0 0.0
      %751 = vmatpush2.msra.mxu0 0.0
      %752 = vmatprep.subr.mxu0 0.0
      %753 = vmatpush2.msra.mxu0 0.0
      %754 = vmatprep.subr.mxu0 0.0
      %755 = vmatpush2.msra.mxu0 0.0
      %756 = vmatprep.subr.mxu0 0.0
      %757 = vmatpush2.msra.mxu0 0.0
      %758 = vmatprep.mubr.f32.mxu0 0.0
      %759 = vmatmul.mubr.f32.gmra.mxu0 %v276
      %v760 = vpop.f32.mrf.mxu0
      %v761 = vadd.f32 %v257, %v760
      %v762 = vpop.f32.mrf.mxu0
      %763 = vmatprep.mubr.f32.mxu0 0.0
      %764 = vmatmul.mubr.f32.gmra.mxu0 %v279
      %v765 = vpop.f32.mrf.mxu0
      %v766 = vadd.f32 %v262, %v765
      %v767 = vpop.f32.mrf.mxu0
      %768 = vmatprep.mubr.f32.mxu0 0.0
      %769 = vmatmul.mubr.f32.gmra.mxu0 %v282
      %v770 = vpop.f32.mrf.mxu0
      %v771 = vadd.f32 %v267, %v770
      %v772 = vpop.f32.mrf.mxu0
      %773 = vmatprep.mubr.f32.mxu0 0.0
      %774 = vmatmul.mubr.f32.gmra.mxu0 %v285
      %v775 = vpop.f32.mrf.mxu0
      %v776 = vadd.f32 %v272, %v775
      %v777 = vpop.f32.mrf.mxu0
      %778 = vdwg.mxu0
      %s779 = scalar_lea.vmem %s194, 96
      %780 = vst.msk [vmem:[%s779] sm:$0xff] %vm374, %v761
      %781 = vst.msk [vmem:[%s779 + $0x8] sm:$0xff] %vm374, %v766
      %782 = vst.msk [vmem:[%s779 + $0x10] sm:$0xff] %vm374, %v771
      %783 = vst.msk [vmem:[%s779 + $0x18] sm:$0xff] %vm374, %v776
      %s784 = sadd.s32 %s204, 4
      %p785 = scmp.lt.s32.totalorder %s784, 13
      %s786 = scalar_select %p785, %s784, 13
      %s787 = scalar_lea.vmem %s184, %s786
      %v788 = vld [vmem:[%s787] sm:$0x7]
      %v789 = vld [vmem:[%s787 + $0x10] sm:$0x7]
      %v790 = vld [vmem:[%s787 + $0x20] sm:$0x7]
      %v792 = vrot.slane %v789, 5
      %v795 = vrot.slane %v790, 2
      %v798 = vrot.slane %v788, 7
      %799 = vrot.lane.b32.xlu0 %v798, 127
      %v800 = vpop.permute.xlu0 %799
      %v802 = vrot.slane %v789, 4
      %803 = vrot.lane.b32.xlu0 %v802, 127
      %v804 = vpop.permute.xlu0 %803
      %v806 = vrot.slane %v790, 1
      %807 = vrot.lane.b32.xlu0 %v806, 127
      %v808 = vpop.permute.xlu0 %807
      %v810 = vrot.slane %v788, 6
      %811 = vrot.lane.b32.xlu0 %v810, 126
      %v812 = vpop.permute.xlu0 %811
      %v814 = vrot.slane %v789, 3
      %815 = vrot.lane.b32.xlu0 %v814, 126
      %v816 = vpop.permute.xlu0 %815
      %818 = vrot.lane.b32.xlu0 %v790, 126
      %v819 = vpop.permute.xlu0 %818
      %v820 = vsel %vm240, %v788, %v792
      %v821 = vsel %vm242, %v820, %v795
      %v822 = vsel %vm244, %v795, %v800
      %v823 = vsel %vm246, %v822, %v804
      %v824 = vsel %vm248, %v823, %v808
      %v825 = vsel %vm250, %v808, %v812
      %v826 = vsel %vm252, %v825, %v816
      %v827 = vsel %vm240, %v819, 0
      %829 = vmatprep.subr.mxu0 0.0
      %830 = vmatpush1.msra.mxu0 0.0
      %831 = vmatprep.subr.mxu0 0.0
      %832 = vmatpush1.msra.mxu0 0.0
      %833 = vmatprep.subr.mxu0 0.0
      %834 = vmatpush1.msra.mxu0 0.0
      %835 = vmatprep.subr.mxu0 0.0
      %836 = vmatpush1.msra.mxu0 0.0
      %837 = vmatprep.subr.mxu0 0.0
      %838 = vmatpush1.msra.mxu0 0.0
      %839 = vmatprep.subr.mxu0 0.0
      %840 = vmatpush1.msra.mxu0 0.0
      %841 = vmatprep.subr.mxu0 0.0
      %842 = vmatpush1.msra.mxu0 0.0
      %843 = vmatprep.subr.mxu0 0.0
      %844 = vmatpush1.msra.mxu0 0.0
      %845 = vmatprep.subr.mxu0 0.0
      %846 = vmatpush1.msra.mxu0 0.0
      %847 = vmatprep.subr.mxu0 0.0
      %848 = vmatpush1.msra.mxu0 0.0
      %849 = vmatprep.subr.mxu0 0.0
      %850 = vmatpush1.msra.mxu0 0.0
      %851 = vmatprep.subr.mxu0 0.0
      %852 = vmatpush1.msra.mxu0 0.0
      %853 = vmatprep.subr.mxu0 0.0
      %854 = vmatpush1.msra.mxu0 %v827
      %855 = vmatprep.subr.mxu0 0.0
      %856 = vmatpush1.msra.mxu0 %v826
      %857 = vmatprep.subr.mxu0 0.0
      %858 = vmatpush1.msra.mxu0 %v824
      %859 = vmatprep.subr.mxu0 0.0
      %860 = vmatpush1.msra.mxu0 %v821
      %861 = vmatprep.subr.mxu0 0.0
      %862 = vmatpush2.msra.mxu0 0.0
      %863 = vmatprep.subr.mxu0 0.0
      %864 = vmatpush2.msra.mxu0 0.0
      %865 = vmatprep.subr.mxu0 0.0
      %866 = vmatpush2.msra.mxu0 0.0
      %867 = vmatprep.subr.mxu0 0.0
      %868 = vmatpush2.msra.mxu0 0.0
      %869 = vmatprep.subr.mxu0 0.0
      %870 = vmatpush2.msra.mxu0 0.0
      %871 = vmatprep.subr.mxu0 0.0
      %872 = vmatpush2.msra.mxu0 0.0
      %873 = vmatprep.subr.mxu0 0.0
      %874 = vmatpush2.msra.mxu0 0.0
      %875 = vmatprep.subr.mxu0 0.0
      %876 = vmatpush2.msra.mxu0 0.0
      %877 = vmatprep.subr.mxu0 0.0
      %878 = vmatpush2.msra.mxu0 0.0
      %879 = vmatprep.subr.mxu0 0.0
      %880 = vmatpush2.msra.mxu0 0.0
      %881 = vmatprep.subr.mxu0 0.0
      %882 = vmatpush2.msra.mxu0 0.0
      %883 = vmatprep.subr.mxu0 0.0
      %884 = vmatpush2.msra.mxu0 0.0
      %885 = vmatprep.subr.mxu0 0.0
      %886 = vmatpush2.msra.mxu0 0.0
      %887 = vmatprep.subr.mxu0 0.0
      %888 = vmatpush2.msra.mxu0 0.0
      %889 = vmatprep.subr.mxu0 0.0
      %890 = vmatpush2.msra.mxu0 0.0
      %891 = vmatprep.subr.mxu0 0.0
      %892 = vmatpush2.msra.mxu0 0.0
      %893 = vmatprep.mubr.f32.mxu0 0.0
      %894 = vmatmul.mubr.f32.gmra.mxu0 %v276
      %v895 = vpop.f32.mrf.mxu0
      %v896 = vadd.f32 %v257, %v895
      %v897 = vpop.f32.mrf.mxu0
      %898 = vmatprep.mubr.f32.mxu0 0.0
      %899 = vmatmul.mubr.f32.gmra.mxu0 %v279
      %v900 = vpop.f32.mrf.mxu0
      %v901 = vadd.f32 %v262, %v900
      %v902 = vpop.f32.mrf.mxu0
      %903 = vmatprep.mubr.f32.mxu0 0.0
      %904 = vmatmul.mubr.f32.gmra.mxu0 %v282
      %v905 = vpop.f32.mrf.mxu0
      %v906 = vadd.f32 %v267, %v905
      %v907 = vpop.f32.mrf.mxu0
      %908 = vmatprep.mubr.f32.mxu0 0.0
      %909 = vmatmul.mubr.f32.gmra.mxu0 %v285
      %v910 = vpop.f32.mrf.mxu0
      %v911 = vadd.f32 %v272, %v910
      %v912 = vpop.f32.mrf.mxu0
      %913 = vdwg.mxu0
      %s914 = scalar_lea.vmem %s194, 128
      %915 = vst.msk [vmem:[%s914] sm:$0xff] %vm374, %v896
      %916 = vst.msk [vmem:[%s914 + $0x8] sm:$0xff] %vm374, %v901
      %917 = vst.msk [vmem:[%s914 + $0x10] sm:$0xff] %vm374, %v906
      %918 = vst.msk [vmem:[%s914 + $0x18] sm:$0xff] %vm374, %v911
      %s919 = sadd.s32 %s204, 5
      %p920 = scmp.lt.s32.totalorder %s919, 13
      %s921 = scalar_select %p920, %s919, 13
      %s922 = scalar_lea.vmem %s184, %s921
      %v923 = vld [vmem:[%s922] sm:$0x7]
      %v924 = vld [vmem:[%s922 + $0x10] sm:$0x7]
      %v925 = vld [vmem:[%s922 + $0x20] sm:$0x7]
      %v927 = vrot.slane %v924, 5
      %v930 = vrot.slane %v925, 2
      %v933 = vrot.slane %v923, 7
      %934 = vrot.lane.b32.xlu0 %v933, 127
      %v935 = vpop.permute.xlu0 %934
      %v937 = vrot.slane %v924, 4
      %938 = vrot.lane.b32.xlu0 %v937, 127
      %v939 = vpop.permute.xlu0 %938
      %v941 = vrot.slane %v925, 1
      %942 = vrot.lane.b32.xlu0 %v941, 127
      %v943 = vpop.permute.xlu0 %942
      %v945 = vrot.slane %v923, 6
      %946 = vrot.lane.b32.xlu0 %v945, 126
      %v947 = vpop.permute.xlu0 %946
      %v949 = vrot.slane %v924, 3
      %950 = vrot.lane.b32.xlu0 %v949, 126
      %v951 = vpop.permute.xlu0 %950
      %953 = vrot.lane.b32.xlu0 %v925, 126
      %v954 = vpop.permute.xlu0 %953
      %v955 = vsel %vm240, %v923, %v927
      %v956 = vsel %vm242, %v955, %v930
      %v957 = vsel %vm244, %v930, %v935
      %v958 = vsel %vm246, %v957, %v939
      %v959 = vsel %vm248, %v958, %v943
      %v960 = vsel %vm250, %v943, %v947
      %v961 = vsel %vm252, %v960, %v951
      %v962 = vsel %vm240, %v954, 0
      %964 = vmatprep.subr.mxu0 0.0
      %965 = vmatpush1.msra.mxu0 0.0
      %966 = vmatprep.subr.mxu0 0.0
      %967 = vmatpush1.msra.mxu0 0.0
      %968 = vmatprep.subr.mxu0 0.0
      %969 = vmatpush1.msra.mxu0 0.0
      %970 = vmatprep.subr.mxu0 0.0
      %971 = vmatpush1.msra.mxu0 0.0
      %972 = vmatprep.subr.mxu0 0.0
      %973 = vmatpush1.msra.mxu0 0.0
      %974 = vmatprep.subr.mxu0 0.0
      %975 = vmatpush1.msra.mxu0 0.0
      %976 = vmatprep.subr.mxu0 0.0
      %977 = vmatpush1.msra.mxu0 0.0
      %978 = vmatprep.subr.mxu0 0.0
      %979 = vmatpush1.msra.mxu0 0.0
      %980 = vmatprep.subr.mxu0 0.0
      %981 = vmatpush1.msra.mxu0 0.0
      %982 = vmatprep.subr.mxu0 0.0
      %983 = vmatpush1.msra.mxu0 0.0
      %984 = vmatprep.subr.mxu0 0.0
      %985 = vmatpush1.msra.mxu0 0.0
      %986 = vmatprep.subr.mxu0 0.0
      %987 = vmatpush1.msra.mxu0 0.0
      %988 = vmatprep.subr.mxu0 0.0
      %989 = vmatpush1.msra.mxu0 %v962
      %990 = vmatprep.subr.mxu0 0.0
      %991 = vmatpush1.msra.mxu0 %v961
      %992 = vmatprep.subr.mxu0 0.0
      %993 = vmatpush1.msra.mxu0 %v959
      %994 = vmatprep.subr.mxu0 0.0
      %995 = vmatpush1.msra.mxu0 %v956
      %996 = vmatprep.subr.mxu0 0.0
      %997 = vmatpush2.msra.mxu0 0.0
      %998 = vmatprep.subr.mxu0 0.0
      %999 = vmatpush2.msra.mxu0 0.0
      %1000 = vmatprep.subr.mxu0 0.0
      %1001 = vmatpush2.msra.mxu0 0.0
      %1002 = vmatprep.subr.mxu0 0.0
      %1003 = vmatpush2.msra.mxu0 0.0
      %1004 = vmatprep.subr.mxu0 0.0
      %1005 = vmatpush2.msra.mxu0 0.0
      %1006 = vmatprep.subr.mxu0 0.0
      %1007 = vmatpush2.msra.mxu0 0.0
      %1008 = vmatprep.subr.mxu0 0.0
      %1009 = vmatpush2.msra.mxu0 0.0
      %1010 = vmatprep.subr.mxu0 0.0
      %1011 = vmatpush2.msra.mxu0 0.0
      %1012 = vmatprep.subr.mxu0 0.0
      %1013 = vmatpush2.msra.mxu0 0.0
      %1014 = vmatprep.subr.mxu0 0.0
      %1015 = vmatpush2.msra.mxu0 0.0
      %1016 = vmatprep.subr.mxu0 0.0
      %1017 = vmatpush2.msra.mxu0 0.0
      %1018 = vmatprep.subr.mxu0 0.0
      %1019 = vmatpush2.msra.mxu0 0.0
      %1020 = vmatprep.subr.mxu0 0.0
      %1021 = vmatpush2.msra.mxu0 0.0
      %1022 = vmatprep.subr.mxu0 0.0
      %1023 = vmatpush2.msra.mxu0 0.0
      %1024 = vmatprep.subr.mxu0 0.0
      %1025 = vmatpush2.msra.mxu0 0.0
      %1026 = vmatprep.subr.mxu0 0.0
      %1027 = vmatpush2.msra.mxu0 0.0
      %1028 = vmatprep.mubr.f32.mxu0 0.0
      %1029 = vmatmul.mubr.f32.gmra.mxu0 %v276
      %v1030 = vpop.f32.mrf.mxu0
      %v1031 = vadd.f32 %v257, %v1030
      %v1032 = vpop.f32.mrf.mxu0
      %1033 = vmatprep.mubr.f32.mxu0 0.0
      %1034 = vmatmul.mubr.f32.gmra.mxu0 %v279
      %v1035 = vpop.f32.mrf.mxu0
      %v1036 = vadd.f32 %v262, %v1035
      %v1037 = vpop.f32.mrf.mxu0
      %1038 = vmatprep.mubr.f32.mxu0 0.0
      %1039 = vmatmul.mubr.f32.gmra.mxu0 %v282
      %v1040 = vpop.f32.mrf.mxu0
      %v1041 = vadd.f32 %v267, %v1040
      %v1042 = vpop.f32.mrf.mxu0
      %1043 = vmatprep.mubr.f32.mxu0 0.0
      %1044 = vmatmul.mubr.f32.gmra.mxu0 %v285
      %v1045 = vpop.f32.mrf.mxu0
      %v1046 = vadd.f32 %v272, %v1045
      %v1047 = vpop.f32.mrf.mxu0
      %1048 = vdwg.mxu0
      %s1049 = scalar_lea.vmem %s194, 160
      %1050 = vst.msk [vmem:[%s1049] sm:$0xff] %vm374, %v1031
      %1051 = vst.msk [vmem:[%s1049 + $0x8] sm:$0xff] %vm374, %v1036
      %1052 = vst.msk [vmem:[%s1049 + $0x10] sm:$0xff] %vm374, %v1041
      %1053 = vst.msk [vmem:[%s1049 + $0x18] sm:$0xff] %vm374, %v1046
      %s1054 = sadd.s32 %s204, 6
      %p1055 = scmp.lt.s32.totalorder %s1054, 13
      %s1056 = scalar_select %p1055, %s1054, 13
      %s1057 = scalar_lea.vmem %s184, %s1056
      %v1058 = vld [vmem:[%s1057] sm:$0x7]
      %v1059 = vld [vmem:[%s1057 + $0x10] sm:$0x7]
      %v1060 = vld [vmem:[%s1057 + $0x20] sm:$0x7]
      %v1062 = vrot.slane %v1059, 5
      %v1065 = vrot.slane %v1060, 2
      %v1068 = vrot.slane %v1058, 7
      %1069 = vrot.lane.b32.xlu0 %v1068, 127
      %v1070 = vpop.permute.xlu0 %1069
      %v1072 = vrot.slane %v1059, 4
      %1073 = vrot.lane.b32.xlu0 %v1072, 127
      %v1074 = vpop.permute.xlu0 %1073
      %v1076 = vrot.slane %v1060, 1
      %1077 = vrot.lane.b32.xlu0 %v1076, 127
      %v1078 = vpop.permute.xlu0 %1077
      %v1080 = vrot.slane %v1058, 6
      %1081 = vrot.lane.b32.xlu0 %v1080, 126
      %v1082 = vpop.permute.xlu0 %1081
      %v1084 = vrot.slane %v1059, 3
      %1085 = vrot.lane.b32.xlu0 %v1084, 126
      %v1086 = vpop.permute.xlu0 %1085
      %1088 = vrot.lane.b32.xlu0 %v1060, 126
      %v1089 = vpop.permute.xlu0 %1088
      %v1090 = vsel %vm240, %v1058, %v1062
      %v1091 = vsel %vm242, %v1090, %v1065
      %v1092 = vsel %vm244, %v1065, %v1070
      %v1093 = vsel %vm246, %v1092, %v1074
      %v1094 = vsel %vm248, %v1093, %v1078
      %v1095 = vsel %vm250, %v1078, %v1082
      %v1096 = vsel %vm252, %v1095, %v1086
      %v1097 = vsel %vm240, %v1089, 0
      %1099 = vmatprep.subr.mxu0 0.0
      %1100 = vmatpush1.msra.mxu0 0.0
      %1101 = vmatprep.subr.mxu0 0.0
      %1102 = vmatpush1.msra.mxu0 0.0
      %1103 = vmatprep.subr.mxu0 0.0
      %1104 = vmatpush1.msra.mxu0 0.0
      %1105 = vmatprep.subr.mxu0 0.0
      %1106 = vmatpush1.msra.mxu0 0.0
      %1107 = vmatprep.subr.mxu0 0.0
      %1108 = vmatpush1.msra.mxu0 0.0
      %1109 = vmatprep.subr.mxu0 0.0
      %1110 = vmatpush1.msra.mxu0 0.0
      %1111 = vmatprep.subr.mxu0 0.0
      %1112 = vmatpush1.msra.mxu0 0.0
      %1113 = vmatprep.subr.mxu0 0.0
      %1114 = vmatpush1.msra.mxu0 0.0
      %1115 = vmatprep.subr.mxu0 0.0
      %1116 = vmatpush1.msra.mxu0 0.0
      %1117 = vmatprep.subr.mxu0 0.0
      %1118 = vmatpush1.msra.mxu0 0.0
      %1119 = vmatprep.subr.mxu0 0.0
      %1120 = vmatpush1.msra.mxu0 0.0
      %1121 = vmatprep.subr.mxu0 0.0
      %1122 = vmatpush1.msra.mxu0 0.0
      %1123 = vmatprep.subr.mxu0 0.0
      %1124 = vmatpush1.msra.mxu0 %v1097
      %1125 = vmatprep.subr.mxu0 0.0
      %1126 = vmatpush1.msra.mxu0 %v1096
      %1127 = vmatprep.subr.mxu0 0.0
      %1128 = vmatpush1.msra.mxu0 %v1094
      %1129 = vmatprep.subr.mxu0 0.0
      %1130 = vmatpush1.msra.mxu0 %v1091
      %1131 = vmatprep.subr.mxu0 0.0
      %1132 = vmatpush2.msra.mxu0 0.0
      %1133 = vmatprep.subr.mxu0 0.0
      %1134 = vmatpush2.msra.mxu0 0.0
      %1135 = vmatprep.subr.mxu0 0.0
      %1136 = vmatpush2.msra.mxu0 0.0
      %1137 = vmatprep.subr.mxu0 0.0
      %1138 = vmatpush2.msra.mxu0 0.0
      %1139 = vmatprep.subr.mxu0 0.0
      %1140 = vmatpush2.msra.mxu0 0.0
      %1141 = vmatprep.subr.mxu0 0.0
      %1142 = vmatpush2.msra.mxu0 0.0
      %1143 = vmatprep.subr.mxu0 0.0
      %1144 = vmatpush2.msra.mxu0 0.0
      %1145 = vmatprep.subr.mxu0 0.0
      %1146 = vmatpush2.msra.mxu0 0.0
      %1147 = vmatprep.subr.mxu0 0.0
      %1148 = vmatpush2.msra.mxu0 0.0
      %1149 = vmatprep.subr.mxu0 0.0
      %1150 = vmatpush2.msra.mxu0 0.0
      %1151 = vmatprep.subr.mxu0 0.0
      %1152 = vmatpush2.msra.mxu0 0.0
      %1153 = vmatprep.subr.mxu0 0.0
      %1154 = vmatpush2.msra.mxu0 0.0
      %1155 = vmatprep.subr.mxu0 0.0
      %1156 = vmatpush2.msra.mxu0 0.0
      %1157 = vmatprep.subr.mxu0 0.0
      %1158 = vmatpush2.msra.mxu0 0.0
      %1159 = vmatprep.subr.mxu0 0.0
      %1160 = vmatpush2.msra.mxu0 0.0
      %1161 = vmatprep.subr.mxu0 0.0
      %1162 = vmatpush2.msra.mxu0 0.0
      %1163 = vmatprep.mubr.f32.mxu0 0.0
      %1164 = vmatmul.mubr.f32.gmra.mxu0 %v276
      %v1165 = vpop.f32.mrf.mxu0
      %v1166 = vadd.f32 %v257, %v1165
      %v1167 = vpop.f32.mrf.mxu0
      %1168 = vmatprep.mubr.f32.mxu0 0.0
      %1169 = vmatmul.mubr.f32.gmra.mxu0 %v279
      %v1170 = vpop.f32.mrf.mxu0
      %v1171 = vadd.f32 %v262, %v1170
      %v1172 = vpop.f32.mrf.mxu0
      %1173 = vmatprep.mubr.f32.mxu0 0.0
      %1174 = vmatmul.mubr.f32.gmra.mxu0 %v282
      %v1175 = vpop.f32.mrf.mxu0
      %v1176 = vadd.f32 %v267, %v1175
      %v1177 = vpop.f32.mrf.mxu0
      %1178 = vmatprep.mubr.f32.mxu0 0.0
      %1179 = vmatmul.mubr.f32.gmra.mxu0 %v285
      %v1180 = vpop.f32.mrf.mxu0
      %v1181 = vadd.f32 %v272, %v1180
      %v1182 = vpop.f32.mrf.mxu0
      %1183 = vdwg.mxu0
      %s1184 = scalar_lea.vmem %s194, 192
      %1185 = vst.msk [vmem:[%s1184] sm:$0xff] %vm374, %v1166
      %1186 = vst.msk [vmem:[%s1184 + $0x8] sm:$0xff] %vm374, %v1171
      %1187 = vst.msk [vmem:[%s1184 + $0x10] sm:$0xff] %vm374, %v1176
      %1188 = vst.msk [vmem:[%s1184 + $0x18] sm:$0xff] %vm374, %v1181
      %s1189 = sadd.s32 %s204, 7
      %p1190 = scmp.lt.s32.totalorder %s1189, 13
      %s1191 = scalar_select %p1190, %s1189, 13
      %s1192 = scalar_lea.vmem %s184, %s1191
      %v1193 = vld [vmem:[%s1192] sm:$0x7]
      %v1194 = vld [vmem:[%s1192 + $0x10] sm:$0x7]
      %v1195 = vld [vmem:[%s1192 + $0x20] sm:$0x7]
      %v1197 = vrot.slane %v1194, 5
      %v1200 = vrot.slane %v1195, 2
      %v1203 = vrot.slane %v1193, 7
      %1204 = vrot.lane.b32.xlu0 %v1203, 127
      %v1205 = vpop.permute.xlu0 %1204
      %v1207 = vrot.slane %v1194, 4
      %1208 = vrot.lane.b32.xlu0 %v1207, 127
      %v1209 = vpop.permute.xlu0 %1208
      %v1211 = vrot.slane %v1195, 1
      %1212 = vrot.lane.b32.xlu0 %v1211, 127
      %v1213 = vpop.permute.xlu0 %1212
      %v1215 = vrot.slane %v1193, 6
      %1216 = vrot.lane.b32.xlu0 %v1215, 126
      %v1217 = vpop.permute.xlu0 %1216
      %v1219 = vrot.slane %v1194, 3
      %1220 = vrot.lane.b32.xlu0 %v1219, 126
      %v1221 = vpop.permute.xlu0 %1220
      %1223 = vrot.lane.b32.xlu0 %v1195, 126
      %v1224 = vpop.permute.xlu0 %1223
      %v1225 = vsel %vm240, %v1193, %v1197
      %v1226 = vsel %vm242, %v1225, %v1200
      %v1227 = vsel %vm244, %v1200, %v1205
      %v1228 = vsel %vm246, %v1227, %v1209
      %v1229 = vsel %vm248, %v1228, %v1213
      %v1230 = vsel %vm250, %v1213, %v1217
      %v1231 = vsel %vm252, %v1230, %v1221
      %v1232 = vsel %vm240, %v1224, 0
      %1234 = vmatprep.subr.mxu0 0.0
      %1235 = vmatpush1.msra.mxu0 0.0
      %1236 = vmatprep.subr.mxu0 0.0
      %1237 = vmatpush1.msra.mxu0 0.0
      %1238 = vmatprep.subr.mxu0 0.0
      %1239 = vmatpush1.msra.mxu0 0.0
      %1240 = vmatprep.subr.mxu0 0.0
      %1241 = vmatpush1.msra.mxu0 0.0
      %1242 = vmatprep.subr.mxu0 0.0
      %1243 = vmatpush1.msra.mxu0 0.0
      %1244 = vmatprep.subr.mxu0 0.0
      %1245 = vmatpush1.msra.mxu0 0.0
      %1246 = vmatprep.subr.mxu0 0.0
      %1247 = vmatpush1.msra.mxu0 0.0
      %1248 = vmatprep.subr.mxu0 0.0
      %1249 = vmatpush1.msra.mxu0 0.0
      %1250 = vmatprep.subr.mxu0 0.0
      %1251 = vmatpush1.msra.mxu0 0.0
      %1252 = vmatprep.subr.mxu0 0.0
      %1253 = vmatpush1.msra.mxu0 0.0
      %1254 = vmatprep.subr.mxu0 0.0
      %1255 = vmatpush1.msra.mxu0 0.0
      %1256 = vmatprep.subr.mxu0 0.0
      %1257 = vmatpush1.msra.mxu0 0.0
      %1258 = vmatprep.subr.mxu0 0.0
      %1259 = vmatpush1.msra.mxu0 %v1232
      %1260 = vmatprep.subr.mxu0 0.0
      %1261 = vmatpush1.msra.mxu0 %v1231
      %1262 = vmatprep.subr.mxu0 0.0
      %1263 = vmatpush1.msra.mxu0 %v1229
      %1264 = vmatprep.subr.mxu0 0.0
      %1265 = vmatpush1.msra.mxu0 %v1226
      %1266 = vmatprep.subr.mxu0 0.0
      %1267 = vmatpush2.msra.mxu0 0.0
      %1268 = vmatprep.subr.mxu0 0.0
      %1269 = vmatpush2.msra.mxu0 0.0
      %1270 = vmatprep.subr.mxu0 0.0
      %1271 = vmatpush2.msra.mxu0 0.0
      %1272 = vmatprep.subr.mxu0 0.0
      %1273 = vmatpush2.msra.mxu0 0.0
      %1274 = vmatprep.subr.mxu0 0.0
      %1275 = vmatpush2.msra.mxu0 0.0
      %1276 = vmatprep.subr.mxu0 0.0
      %1277 = vmatpush2.msra.mxu0 0.0
      %1278 = vmatprep.subr.mxu0 0.0
      %1279 = vmatpush2.msra.mxu0 0.0
      %1280 = vmatprep.subr.mxu0 0.0
      %1281 = vmatpush2.msra.mxu0 0.0
      %1282 = vmatprep.subr.mxu0 0.0
      %1283 = vmatpush2.msra.mxu0 0.0
      %1284 = vmatprep.subr.mxu0 0.0
      %1285 = vmatpush2.msra.mxu0 0.0
      %1286 = vmatprep.subr.mxu0 0.0
      %1287 = vmatpush2.msra.mxu0 0.0
      %1288 = vmatprep.subr.mxu0 0.0
      %1289 = vmatpush2.msra.mxu0 0.0
      %1290 = vmatprep.subr.mxu0 0.0
      %1291 = vmatpush2.msra.mxu0 0.0
      %1292 = vmatprep.subr.mxu0 0.0
      %1293 = vmatpush2.msra.mxu0 0.0
      %1294 = vmatprep.subr.mxu0 0.0
      %1295 = vmatpush2.msra.mxu0 0.0
      %1296 = vmatprep.subr.mxu0 0.0
      %1297 = vmatpush2.msra.mxu0 0.0
      %1298 = vmatprep.mubr.f32.mxu0 0.0
      %1299 = vmatmul.mubr.f32.gmra.mxu0 %v276
      %v1300 = vpop.f32.mrf.mxu0
      %v1301 = vadd.f32 %v257, %v1300
      %v1302 = vpop.f32.mrf.mxu0
      %1303 = vmatprep.mubr.f32.mxu0 0.0
      %1304 = vmatmul.mubr.f32.gmra.mxu0 %v279
      %v1305 = vpop.f32.mrf.mxu0
      %v1306 = vadd.f32 %v262, %v1305
      %v1307 = vpop.f32.mrf.mxu0
      %1308 = vmatprep.mubr.f32.mxu0 0.0
      %1309 = vmatmul.mubr.f32.gmra.mxu0 %v282
      %v1310 = vpop.f32.mrf.mxu0
      %v1311 = vadd.f32 %v267, %v1310
      %v1312 = vpop.f32.mrf.mxu0
      %1313 = vmatprep.mubr.f32.mxu0 0.0
      %1314 = vmatmul.mubr.f32.gmra.mxu0 %v285
      %v1315 = vpop.f32.mrf.mxu0
      %v1316 = vadd.f32 %v272, %v1315
      %v1317 = vpop.f32.mrf.mxu0
      %1318 = vdwg.mxu0
      %s1319 = scalar_lea.vmem %s194, 224
      %1320 = vst.msk [vmem:[%s1319] sm:$0xff] %vm374, %v1301
      %1321 = vst.msk [vmem:[%s1319 + $0x8] sm:$0xff] %vm374, %v1306
      %1322 = vst.msk [vmem:[%s1319 + $0x10] sm:$0xff] %vm374, %v1311
      %1323 = vst.msk [vmem:[%s1319 + $0x18] sm:$0xff] %vm374, %v1316
      %s1324 = sadd.s32 %s204, 8
      %p1325 = scmp.lt.s32.totalorder %s1324, 13
      %s1326 = scalar_select %p1325, %s1324, 13
      %s1327 = scalar_lea.vmem %s184, %s1326
      %v1328 = vld [vmem:[%s1327] sm:$0x7]
      %v1329 = vld [vmem:[%s1327 + $0x10] sm:$0x7]
      %v1330 = vld [vmem:[%s1327 + $0x20] sm:$0x7]
      %v1332 = vrot.slane %v1329, 5
      %v1335 = vrot.slane %v1330, 2
      %v1338 = vrot.slane %v1328, 7
      %1339 = vrot.lane.b32.xlu0 %v1338, 127
      %v1340 = vpop.permute.xlu0 %1339
      %v1342 = vrot.slane %v1329, 4
      %1343 = vrot.lane.b32.xlu0 %v1342, 127
      %v1344 = vpop.permute.xlu0 %1343
      %v1346 = vrot.slane %v1330, 1
      %1347 = vrot.lane.b32.xlu0 %v1346, 127
      %v1348 = vpop.permute.xlu0 %1347
      %v1350 = vrot.slane %v1328, 6
      %1351 = vrot.lane.b32.xlu0 %v1350, 126
      %v1352 = vpop.permute.xlu0 %1351
      %v1354 = vrot.slane %v1329, 3
      %1355 = vrot.lane.b32.xlu0 %v1354, 126
      %v1356 = vpop.permute.xlu0 %1355
      %1358 = vrot.lane.b32.xlu0 %v1330, 126
      %v1359 = vpop.permute.xlu0 %1358
      %v1360 = vsel %vm240, %v1328, %v1332
      %v1361 = vsel %vm242, %v1360, %v1335
      %v1362 = vsel %vm244, %v1335, %v1340
      %v1363 = vsel %vm246, %v1362, %v1344
      %v1364 = vsel %vm248, %v1363, %v1348
      %v1365 = vsel %vm250, %v1348, %v1352
      %v1366 = vsel %vm252, %v1365, %v1356
      %v1367 = vsel %vm240, %v1359, 0
      %1369 = vmatprep.subr.mxu0 0.0
      %1370 = vmatpush1.msra.mxu0 0.0
      %1371 = vmatprep.subr.mxu0 0.0
      %1372 = vmatpush1.msra.mxu0 0.0
      %1373 = vmatprep.subr.mxu0 0.0
      %1374 = vmatpush1.msra.mxu0 0.0
      %1375 = vmatprep.subr.mxu0 0.0
      %1376 = vmatpush1.msra.mxu0 0.0
      %1377 = vmatprep.subr.mxu0 0.0
      %1378 = vmatpush1.msra.mxu0 0.0
      %1379 = vmatprep.subr.mxu0 0.0
      %1380 = vmatpush1.msra.mxu0 0.0
      %1381 = vmatprep.subr.mxu0 0.0
      %1382 = vmatpush1.msra.mxu0 0.0
      %1383 = vmatprep.subr.mxu0 0.0
      %1384 = vmatpush1.msra.mxu0 0.0
      %1385 = vmatprep.subr.mxu0 0.0
      %1386 = vmatpush1.msra.mxu0 0.0
      %1387 = vmatprep.subr.mxu0 0.0
      %1388 = vmatpush1.msra.mxu0 0.0
      %1389 = vmatprep.subr.mxu0 0.0
      %1390 = vmatpush1.msra.mxu0 0.0
      %1391 = vmatprep.subr.mxu0 0.0
      %1392 = vmatpush1.msra.mxu0 0.0
      %1393 = vmatprep.subr.mxu0 0.0
      %1394 = vmatpush1.msra.mxu0 %v1367
      %1395 = vmatprep.subr.mxu0 0.0
      %1396 = vmatpush1.msra.mxu0 %v1366
      %1397 = vmatprep.subr.mxu0 0.0
      %1398 = vmatpush1.msra.mxu0 %v1364
      %1399 = vmatprep.subr.mxu0 0.0
      %1400 = vmatpush1.msra.mxu0 %v1361
      %1401 = vmatprep.subr.mxu0 0.0
      %1402 = vmatpush2.msra.mxu0 0.0
      %1403 = vmatprep.subr.mxu0 0.0
      %1404 = vmatpush2.msra.mxu0 0.0
      %1405 = vmatprep.subr.mxu0 0.0
      %1406 = vmatpush2.msra.mxu0 0.0
      %1407 = vmatprep.subr.mxu0 0.0
      %1408 = vmatpush2.msra.mxu0 0.0
      %1409 = vmatprep.subr.mxu0 0.0
      %1410 = vmatpush2.msra.mxu0 0.0
      %1411 = vmatprep.subr.mxu0 0.0
      %1412 = vmatpush2.msra.mxu0 0.0
      %1413 = vmatprep.subr.mxu0 0.0
      %1414 = vmatpush2.msra.mxu0 0.0
      %1415 = vmatprep.subr.mxu0 0.0
      %1416 = vmatpush2.msra.mxu0 0.0
      %1417 = vmatprep.subr.mxu0 0.0
      %1418 = vmatpush2.msra.mxu0 0.0
      %1419 = vmatprep.subr.mxu0 0.0
      %1420 = vmatpush2.msra.mxu0 0.0
      %1421 = vmatprep.subr.mxu0 0.0
      %1422 = vmatpush2.msra.mxu0 0.0
      %1423 = vmatprep.subr.mxu0 0.0
      %1424 = vmatpush2.msra.mxu0 0.0
      %1425 = vmatprep.subr.mxu0 0.0
      %1426 = vmatpush2.msra.mxu0 0.0
      %1427 = vmatprep.subr.mxu0 0.0
      %1428 = vmatpush2.msra.mxu0 0.0
      %1429 = vmatprep.subr.mxu0 0.0
      %1430 = vmatpush2.msra.mxu0 0.0
      %1431 = vmatprep.subr.mxu0 0.0
      %1432 = vmatpush2.msra.mxu0 0.0
      %1433 = vmatprep.mubr.f32.mxu0 0.0
      %1434 = vmatmul.mubr.f32.gmra.mxu0 %v276
      %v1435 = vpop.f32.mrf.mxu0
      %v1436 = vadd.f32 %v257, %v1435
      %v1437 = vpop.f32.mrf.mxu0
      %1438 = vmatprep.mubr.f32.mxu0 0.0
      %1439 = vmatmul.mubr.f32.gmra.mxu0 %v279
      %v1440 = vpop.f32.mrf.mxu0
      %v1441 = vadd.f32 %v262, %v1440
      %v1442 = vpop.f32.mrf.mxu0
      %1443 = vmatprep.mubr.f32.mxu0 0.0
      %1444 = vmatmul.mubr.f32.gmra.mxu0 %v282
      %v1445 = vpop.f32.mrf.mxu0
      %v1446 = vadd.f32 %v267, %v1445
      %v1447 = vpop.f32.mrf.mxu0
      %1448 = vmatprep.mubr.f32.mxu0 0.0
      %1449 = vmatmul.mubr.f32.gmra.mxu0 %v285
      %v1450 = vpop.f32.mrf.mxu0
      %v1451 = vadd.f32 %v272, %v1450
      %v1452 = vpop.f32.mrf.mxu0
      %1453 = vdwg.mxu0
      %s1454 = scalar_lea.vmem %s194, 256
      %1455 = vst.msk [vmem:[%s1454] sm:$0xff] %vm374, %v1436
      %1456 = vst.msk [vmem:[%s1454 + $0x8] sm:$0xff] %vm374, %v1441
      %1457 = vst.msk [vmem:[%s1454 + $0x10] sm:$0xff] %vm374, %v1446
      %1458 = vst.msk [vmem:[%s1454 + $0x18] sm:$0xff] %vm374, %v1451
      %s1459 = sadd.s32 %s204, 9
      %p1460 = scmp.lt.s32.totalorder %s1459, 13
      %s1461 = scalar_select %p1460, %s1459, 13
      %s1462 = scalar_lea.vmem %s184, %s1461
      %v1463 = vld [vmem:[%s1462] sm:$0x7]
      %v1464 = vld [vmem:[%s1462 + $0x10] sm:$0x7]
      %v1465 = vld [vmem:[%s1462 + $0x20] sm:$0x7]
      %v1467 = vrot.slane %v1464, 5
      %v1470 = vrot.slane %v1465, 2
      %v1473 = vrot.slane %v1463, 7
      %1474 = vrot.lane.b32.xlu0 %v1473, 127
      %v1475 = vpop.permute.xlu0 %1474
      %v1477 = vrot.slane %v1464, 4
      %1478 = vrot.lane.b32.xlu0 %v1477, 127
      %v1479 = vpop.permute.xlu0 %1478
      %v1481 = vrot.slane %v1465, 1
      %1482 = vrot.lane.b32.xlu0 %v1481, 127
      %v1483 = vpop.permute.xlu0 %1482
      %v1485 = vrot.slane %v1463, 6
      %1486 = vrot.lane.b32.xlu0 %v1485, 126
      %v1487 = vpop.permute.xlu0 %1486
      %v1489 = vrot.slane %v1464, 3
      %1490 = vrot.lane.b32.xlu0 %v1489, 126
      %v1491 = vpop.permute.xlu0 %1490
      %1493 = vrot.lane.b32.xlu0 %v1465, 126
      %v1494 = vpop.permute.xlu0 %1493
      %v1495 = vsel %vm240, %v1463, %v1467
      %v1496 = vsel %vm242, %v1495, %v1470
      %v1497 = vsel %vm244, %v1470, %v1475
      %v1498 = vsel %vm246, %v1497, %v1479
      %v1499 = vsel %vm248, %v1498, %v1483
      %v1500 = vsel %vm250, %v1483, %v1487
      %v1501 = vsel %vm252, %v1500, %v1491
      %v1502 = vsel %vm240, %v1494, 0
      %1504 = vmatprep.subr.mxu0 0.0
      %1505 = vmatpush1.msra.mxu0 0.0
      %1506 = vmatprep.subr.mxu0 0.0
      %1507 = vmatpush1.msra.mxu0 0.0
      %1508 = vmatprep.subr.mxu0 0.0
      %1509 = vmatpush1.msra.mxu0 0.0
      %1510 = vmatprep.subr.mxu0 0.0
      %1511 = vmatpush1.msra.mxu0 0.0
      %1512 = vmatprep.subr.mxu0 0.0
      %1513 = vmatpush1.msra.mxu0 0.0
      %1514 = vmatprep.subr.mxu0 0.0
      %1515 = vmatpush1.msra.mxu0 0.0
      %1516 = vmatprep.subr.mxu0 0.0
      %1517 = vmatpush1.msra.mxu0 0.0
      %1518 = vmatprep.subr.mxu0 0.0
      %1519 = vmatpush1.msra.mxu0 0.0
      %1520 = vmatprep.subr.mxu0 0.0
      %1521 = vmatpush1.msra.mxu0 0.0
      %1522 = vmatprep.subr.mxu0 0.0
      %1523 = vmatpush1.msra.mxu0 0.0
      %1524 = vmatprep.subr.mxu0 0.0
      %1525 = vmatpush1.msra.mxu0 0.0
      %1526 = vmatprep.subr.mxu0 0.0
      %1527 = vmatpush1.msra.mxu0 0.0
      %1528 = vmatprep.subr.mxu0 0.0
      %1529 = vmatpush1.msra.mxu0 %v1502
      %1530 = vmatprep.subr.mxu0 0.0
      %1531 = vmatpush1.msra.mxu0 %v1501
      %1532 = vmatprep.subr.mxu0 0.0
      %1533 = vmatpush1.msra.mxu0 %v1499
      %1534 = vmatprep.subr.mxu0 0.0
      %1535 = vmatpush1.msra.mxu0 %v1496
      %1536 = vmatprep.subr.mxu0 0.0
      %1537 = vmatpush2.msra.mxu0 0.0
      %1538 = vmatprep.subr.mxu0 0.0
      %1539 = vmatpush2.msra.mxu0 0.0
      %1540 = vmatprep.subr.mxu0 0.0
      %1541 = vmatpush2.msra.mxu0 0.0
      %1542 = vmatprep.subr.mxu0 0.0
      %1543 = vmatpush2.msra.mxu0 0.0
      %1544 = vmatprep.subr.mxu0 0.0
      %1545 = vmatpush2.msra.mxu0 0.0
      %1546 = vmatprep.subr.mxu0 0.0
      %1547 = vmatpush2.msra.mxu0 0.0
      %1548 = vmatprep.subr.mxu0 0.0
      %1549 = vmatpush2.msra.mxu0 0.0
      %1550 = vmatprep.subr.mxu0 0.0
      %1551 = vmatpush2.msra.mxu0 0.0
      %1552 = vmatprep.subr.mxu0 0.0
      %1553 = vmatpush2.msra.mxu0 0.0
      %1554 = vmatprep.subr.mxu0 0.0
      %1555 = vmatpush2.msra.mxu0 0.0
      %1556 = vmatprep.subr.mxu0 0.0
      %1557 = vmatpush2.msra.mxu0 0.0
      %1558 = vmatprep.subr.mxu0 0.0
      %1559 = vmatpush2.msra.mxu0 0.0
      %1560 = vmatprep.subr.mxu0 0.0
      %1561 = vmatpush2.msra.mxu0 0.0
      %1562 = vmatprep.subr.mxu0 0.0
      %1563 = vmatpush2.msra.mxu0 0.0
      %1564 = vmatprep.subr.mxu0 0.0
      %1565 = vmatpush2.msra.mxu0 0.0
      %1566 = vmatprep.subr.mxu0 0.0
      %1567 = vmatpush2.msra.mxu0 0.0
      %1568 = vmatprep.mubr.f32.mxu0 0.0
      %1569 = vmatmul.mubr.f32.gmra.mxu0 %v276
      %v1570 = vpop.f32.mrf.mxu0
      %v1571 = vadd.f32 %v257, %v1570
      %v1572 = vpop.f32.mrf.mxu0
      %1573 = vmatprep.mubr.f32.mxu0 0.0
      %1574 = vmatmul.mubr.f32.gmra.mxu0 %v279
      %v1575 = vpop.f32.mrf.mxu0
      %v1576 = vadd.f32 %v262, %v1575
      %v1577 = vpop.f32.mrf.mxu0
      %1578 = vmatprep.mubr.f32.mxu0 0.0
      %1579 = vmatmul.mubr.f32.gmra.mxu0 %v282
      %v1580 = vpop.f32.mrf.mxu0
      %v1581 = vadd.f32 %v267, %v1580
      %v1582 = vpop.f32.mrf.mxu0
      %1583 = vmatprep.mubr.f32.mxu0 0.0
      %1584 = vmatmul.mubr.f32.gmra.mxu0 %v285
      %v1585 = vpop.f32.mrf.mxu0
      %v1586 = vadd.f32 %v272, %v1585
      %v1587 = vpop.f32.mrf.mxu0
      %1588 = vdwg.mxu0
      %s1589 = scalar_lea.vmem %s194, 288
      %1590 = vst.msk [vmem:[%s1589] sm:$0xff] %vm374, %v1571
      %1591 = vst.msk [vmem:[%s1589 + $0x8] sm:$0xff] %vm374, %v1576
      %1592 = vst.msk [vmem:[%s1589 + $0x10] sm:$0xff] %vm374, %v1581
      %1593 = vst.msk [vmem:[%s1589 + $0x18] sm:$0xff] %vm374, %v1586
      %s1594 = sadd.s32 %s204, 10
      %p1595 = scmp.lt.s32.totalorder %s1594, 13
      %s1596 = scalar_select %p1595, %s1594, 13
      %s1597 = scalar_lea.vmem %s184, %s1596
      %v1598 = vld [vmem:[%s1597] sm:$0x7]
      %v1599 = vld [vmem:[%s1597 + $0x10] sm:$0x7]
      %v1600 = vld [vmem:[%s1597 + $0x20] sm:$0x7]
      %v1602 = vrot.slane %v1599, 5
      %v1605 = vrot.slane %v1600, 2
      %v1608 = vrot.slane %v1598, 7
      %1609 = vrot.lane.b32.xlu0 %v1608, 127
      %v1610 = vpop.permute.xlu0 %1609
      %v1612 = vrot.slane %v1599, 4
      %1613 = vrot.lane.b32.xlu0 %v1612, 127
      %v1614 = vpop.permute.xlu0 %1613
      %v1616 = vrot.slane %v1600, 1
      %1617 = vrot.lane.b32.xlu0 %v1616, 127
      %v1618 = vpop.permute.xlu0 %1617
      %v1620 = vrot.slane %v1598, 6
      %1621 = vrot.lane.b32.xlu0 %v1620, 126
      %v1622 = vpop.permute.xlu0 %1621
      %v1624 = vrot.slane %v1599, 3
      %1625 = vrot.lane.b32.xlu0 %v1624, 126
      %v1626 = vpop.permute.xlu0 %1625
      %1628 = vrot.lane.b32.xlu0 %v1600, 126
      %v1629 = vpop.permute.xlu0 %1628
      %v1630 = vsel %vm240, %v1598, %v1602
      %v1631 = vsel %vm242, %v1630, %v1605
      %v1632 = vsel %vm244, %v1605, %v1610
      %v1633 = vsel %vm246, %v1632, %v1614
      %v1634 = vsel %vm248, %v1633, %v1618
      %v1635 = vsel %vm250, %v1618, %v1622
      %v1636 = vsel %vm252, %v1635, %v1626
      %v1637 = vsel %vm240, %v1629, 0
      %1639 = vmatprep.subr.mxu0 0.0
      %1640 = vmatpush1.msra.mxu0 0.0
      %1641 = vmatprep.subr.mxu0 0.0
      %1642 = vmatpush1.msra.mxu0 0.0
      %1643 = vmatprep.subr.mxu0 0.0
      %1644 = vmatpush1.msra.mxu0 0.0
      %1645 = vmatprep.subr.mxu0 0.0
      %1646 = vmatpush1.msra.mxu0 0.0
      %1647 = vmatprep.subr.mxu0 0.0
      %1648 = vmatpush1.msra.mxu0 0.0
      %1649 = vmatprep.subr.mxu0 0.0
      %1650 = vmatpush1.msra.mxu0 0.0
      %1651 = vmatprep.subr.mxu0 0.0
      %1652 = vmatpush1.msra.mxu0 0.0
      %1653 = vmatprep.subr.mxu0 0.0
      %1654 = vmatpush1.msra.mxu0 0.0
      %1655 = vmatprep.subr.mxu0 0.0
      %1656 = vmatpush1.msra.mxu0 0.0
      %1657 = vmatprep.subr.mxu0 0.0
      %1658 = vmatpush1.msra.mxu0 0.0
      %1659 = vmatprep.subr.mxu0 0.0
      %1660 = vmatpush1.msra.mxu0 0.0
      %1661 = vmatprep.subr.mxu0 0.0
      %1662 = vmatpush1.msra.mxu0 0.0
      %1663 = vmatprep.subr.mxu0 0.0
      %1664 = vmatpush1.msra.mxu0 %v1637
      %1665 = vmatprep.subr.mxu0 0.0
      %1666 = vmatpush1.msra.mxu0 %v1636
      %1667 = vmatprep.subr.mxu0 0.0
      %1668 = vmatpush1.msra.mxu0 %v1634
      %1669 = vmatprep.subr.mxu0 0.0
      %1670 = vmatpush1.msra.mxu0 %v1631
      %1671 = vmatprep.subr.mxu0 0.0
      %1672 = vmatpush2.msra.mxu0 0.0
      %1673 = vmatprep.subr.mxu0 0.0
      %1674 = vmatpush2.msra.mxu0 0.0
      %1675 = vmatprep.subr.mxu0 0.0
      %1676 = vmatpush2.msra.mxu0 0.0
      %1677 = vmatprep.subr.mxu0 0.0
      %1678 = vmatpush2.msra.mxu0 0.0
      %1679 = vmatprep.subr.mxu0 0.0
      %1680 = vmatpush2.msra.mxu0 0.0
      %1681 = vmatprep.subr.mxu0 0.0
      %1682 = vmatpush2.msra.mxu0 0.0
      %1683 = vmatprep.subr.mxu0 0.0
      %1684 = vmatpush2.msra.mxu0 0.0
      %1685 = vmatprep.subr.mxu0 0.0
      %1686 = vmatpush2.msra.mxu0 0.0
      %1687 = vmatprep.subr.mxu0 0.0
      %1688 = vmatpush2.msra.mxu0 0.0
      %1689 = vmatprep.subr.mxu0 0.0
      %1690 = vmatpush2.msra.mxu0 0.0
      %1691 = vmatprep.subr.mxu0 0.0
      %1692 = vmatpush2.msra.mxu0 0.0
      %1693 = vmatprep.subr.mxu0 0.0
      %1694 = vmatpush2.msra.mxu0 0.0
      %1695 = vmatprep.subr.mxu0 0.0
      %1696 = vmatpush2.msra.mxu0 0.0
      %1697 = vmatprep.subr.mxu0 0.0
      %1698 = vmatpush2.msra.mxu0 0.0
      %1699 = vmatprep.subr.mxu0 0.0
      %1700 = vmatpush2.msra.mxu0 0.0
      %1701 = vmatprep.subr.mxu0 0.0
      %1702 = vmatpush2.msra.mxu0 0.0
      %1703 = vmatprep.mubr.f32.mxu0 0.0
      %1704 = vmatmul.mubr.f32.gmra.mxu0 %v276
      %v1705 = vpop.f32.mrf.mxu0
      %v1706 = vadd.f32 %v257, %v1705
      %v1707 = vpop.f32.mrf.mxu0
      %1708 = vmatprep.mubr.f32.mxu0 0.0
      %1709 = vmatmul.mubr.f32.gmra.mxu0 %v279
      %v1710 = vpop.f32.mrf.mxu0
      %v1711 = vadd.f32 %v262, %v1710
      %v1712 = vpop.f32.mrf.mxu0
      %1713 = vmatprep.mubr.f32.mxu0 0.0
      %1714 = vmatmul.mubr.f32.gmra.mxu0 %v282
      %v1715 = vpop.f32.mrf.mxu0
      %v1716 = vadd.f32 %v267, %v1715
      %v1717 = vpop.f32.mrf.mxu0
      %1718 = vmatprep.mubr.f32.mxu0 0.0
      %1719 = vmatmul.mubr.f32.gmra.mxu0 %v285
      %v1720 = vpop.f32.mrf.mxu0
      %v1721 = vadd.f32 %v272, %v1720
      %v1722 = vpop.f32.mrf.mxu0
      %1723 = vdwg.mxu0
      %s1724 = scalar_lea.vmem %s194, 320
      %1725 = vst.msk [vmem:[%s1724] sm:$0xff] %vm374, %v1706
      %1726 = vst.msk [vmem:[%s1724 + $0x8] sm:$0xff] %vm374, %v1711
      %1727 = vst.msk [vmem:[%s1724 + $0x10] sm:$0xff] %vm374, %v1716
      %1728 = vst.msk [vmem:[%s1724 + $0x18] sm:$0xff] %vm374, %v1721
      %s1729 = sadd.s32 %s204, 11
      %p1730 = scmp.lt.s32.totalorder %s1729, 13
      %s1731 = scalar_select %p1730, %s1729, 13
      %s1732 = scalar_lea.vmem %s184, %s1731
      %v1733 = vld [vmem:[%s1732] sm:$0x7]
      %v1734 = vld [vmem:[%s1732 + $0x10] sm:$0x7]
      %v1735 = vld [vmem:[%s1732 + $0x20] sm:$0x7]
      %v1737 = vrot.slane %v1734, 5
      %v1740 = vrot.slane %v1735, 2
      %v1743 = vrot.slane %v1733, 7
      %1744 = vrot.lane.b32.xlu0 %v1743, 127
      %v1745 = vpop.permute.xlu0 %1744
      %v1747 = vrot.slane %v1734, 4
      %1748 = vrot.lane.b32.xlu0 %v1747, 127
      %v1749 = vpop.permute.xlu0 %1748
      %v1751 = vrot.slane %v1735, 1
      %1752 = vrot.lane.b32.xlu0 %v1751, 127
      %v1753 = vpop.permute.xlu0 %1752
      %v1755 = vrot.slane %v1733, 6
      %1756 = vrot.lane.b32.xlu0 %v1755, 126
      %v1757 = vpop.permute.xlu0 %1756
      %v1759 = vrot.slane %v1734, 3
      %1760 = vrot.lane.b32.xlu0 %v1759, 126
      %v1761 = vpop.permute.xlu0 %1760
      %1763 = vrot.lane.b32.xlu0 %v1735, 126
      %v1764 = vpop.permute.xlu0 %1763
      %v1765 = vsel %vm240, %v1733, %v1737
      %v1766 = vsel %vm242, %v1765, %v1740
      %v1767 = vsel %vm244, %v1740, %v1745
      %v1768 = vsel %vm246, %v1767, %v1749
      %v1769 = vsel %vm248, %v1768, %v1753
      %v1770 = vsel %vm250, %v1753, %v1757
      %v1771 = vsel %vm252, %v1770, %v1761
      %v1772 = vsel %vm240, %v1764, 0
      %1774 = vmatprep.subr.mxu0 0.0
      %1775 = vmatpush1.msra.mxu0 0.0
      %1776 = vmatprep.subr.mxu0 0.0
      %1777 = vmatpush1.msra.mxu0 0.0
      %1778 = vmatprep.subr.mxu0 0.0
      %1779 = vmatpush1.msra.mxu0 0.0
      %1780 = vmatprep.subr.mxu0 0.0
      %1781 = vmatpush1.msra.mxu0 0.0
      %1782 = vmatprep.subr.mxu0 0.0
      %1783 = vmatpush1.msra.mxu0 0.0
      %1784 = vmatprep.subr.mxu0 0.0
      %1785 = vmatpush1.msra.mxu0 0.0
      %1786 = vmatprep.subr.mxu0 0.0
      %1787 = vmatpush1.msra.mxu0 0.0
      %1788 = vmatprep.subr.mxu0 0.0
      %1789 = vmatpush1.msra.mxu0 0.0
      %1790 = vmatprep.subr.mxu0 0.0
      %1791 = vmatpush1.msra.mxu0 0.0
      %1792 = vmatprep.subr.mxu0 0.0
      %1793 = vmatpush1.msra.mxu0 0.0
      %1794 = vmatprep.subr.mxu0 0.0
      %1795 = vmatpush1.msra.mxu0 0.0
      %1796 = vmatprep.subr.mxu0 0.0
      %1797 = vmatpush1.msra.mxu0 0.0
      %1798 = vmatprep.subr.mxu0 0.0
      %1799 = vmatpush1.msra.mxu0 %v1772
      %1800 = vmatprep.subr.mxu0 0.0
      %1801 = vmatpush1.msra.mxu0 %v1771
      %1802 = vmatprep.subr.mxu0 0.0
      %1803 = vmatpush1.msra.mxu0 %v1769
      %1804 = vmatprep.subr.mxu0 0.0
      %1805 = vmatpush1.msra.mxu0 %v1766
      %1806 = vmatprep.subr.mxu0 0.0
      %1807 = vmatpush2.msra.mxu0 0.0
      %1808 = vmatprep.subr.mxu0 0.0
      %1809 = vmatpush2.msra.mxu0 0.0
      %1810 = vmatprep.subr.mxu0 0.0
      %1811 = vmatpush2.msra.mxu0 0.0
      %1812 = vmatprep.subr.mxu0 0.0
      %1813 = vmatpush2.msra.mxu0 0.0
      %1814 = vmatprep.subr.mxu0 0.0
      %1815 = vmatpush2.msra.mxu0 0.0
      %1816 = vmatprep.subr.mxu0 0.0
      %1817 = vmatpush2.msra.mxu0 0.0
      %1818 = vmatprep.subr.mxu0 0.0
      %1819 = vmatpush2.msra.mxu0 0.0
      %1820 = vmatprep.subr.mxu0 0.0
      %1821 = vmatpush2.msra.mxu0 0.0
      %1822 = vmatprep.subr.mxu0 0.0
      %1823 = vmatpush2.msra.mxu0 0.0
      %1824 = vmatprep.subr.mxu0 0.0
      %1825 = vmatpush2.msra.mxu0 0.0
      %1826 = vmatprep.subr.mxu0 0.0
      %1827 = vmatpush2.msra.mxu0 0.0
      %1828 = vmatprep.subr.mxu0 0.0
      %1829 = vmatpush2.msra.mxu0 0.0
      %1830 = vmatprep.subr.mxu0 0.0
      %1831 = vmatpush2.msra.mxu0 0.0
      %1832 = vmatprep.subr.mxu0 0.0
      %1833 = vmatpush2.msra.mxu0 0.0
      %1834 = vmatprep.subr.mxu0 0.0
      %1835 = vmatpush2.msra.mxu0 0.0
      %1836 = vmatprep.subr.mxu0 0.0
      %1837 = vmatpush2.msra.mxu0 0.0
      %1838 = vmatprep.mubr.f32.mxu0 0.0
      %1839 = vmatmul.mubr.f32.gmra.mxu0 %v276
      %v1840 = vpop.f32.mrf.mxu0
      %v1841 = vadd.f32 %v257, %v1840
      %v1842 = vpop.f32.mrf.mxu0
      %1843 = vmatprep.mubr.f32.mxu0 0.0
      %1844 = vmatmul.mubr.f32.gmra.mxu0 %v279
      %v1845 = vpop.f32.mrf.mxu0
      %v1846 = vadd.f32 %v262, %v1845
      %v1847 = vpop.f32.mrf.mxu0
      %1848 = vmatprep.mubr.f32.mxu0 0.0
      %1849 = vmatmul.mubr.f32.gmra.mxu0 %v282
      %v1850 = vpop.f32.mrf.mxu0
      %v1851 = vadd.f32 %v267, %v1850
      %v1852 = vpop.f32.mrf.mxu0
      %1853 = vmatprep.mubr.f32.mxu0 0.0
      %1854 = vmatmul.mubr.f32.gmra.mxu0 %v285
      %v1855 = vpop.f32.mrf.mxu0
      %v1856 = vadd.f32 %v272, %v1855
      %v1857 = vpop.f32.mrf.mxu0
      %1858 = vdwg.mxu0
      %s1859 = scalar_lea.vmem %s194, 352
      %1860 = vst.msk [vmem:[%s1859] sm:$0xff] %vm374, %v1841
      %1861 = vst.msk [vmem:[%s1859 + $0x8] sm:$0xff] %vm374, %v1846
      %1862 = vst.msk [vmem:[%s1859 + $0x10] sm:$0xff] %vm374, %v1851
      %1863 = vst.msk [vmem:[%s1859 + $0x18] sm:$0xff] %vm374, %v1856
      %s1864 = sadd.s32 %s204, 12
      %p1865 = scmp.lt.s32.totalorder %s1864, 13
      %s1866 = scalar_select %p1865, %s1864, 13
      %s1867 = scalar_lea.vmem %s184, %s1866
      %v1868 = vld [vmem:[%s1867] sm:$0x7]
      %v1869 = vld [vmem:[%s1867 + $0x10] sm:$0x7]
      %v1870 = vld [vmem:[%s1867 + $0x20] sm:$0x7]
      %v1872 = vrot.slane %v1869, 5
      %v1875 = vrot.slane %v1870, 2
      %v1878 = vrot.slane %v1868, 7
      %1879 = vrot.lane.b32.xlu0 %v1878, 127
      %v1880 = vpop.permute.xlu0 %1879
      %v1882 = vrot.slane %v1869, 4
      %1883 = vrot.lane.b32.xlu0 %v1882, 127
      %v1884 = vpop.permute.xlu0 %1883
      %v1886 = vrot.slane %v1870, 1
      %1887 = vrot.lane.b32.xlu0 %v1886, 127
      %v1888 = vpop.permute.xlu0 %1887
      %v1890 = vrot.slane %v1868, 6
      %1891 = vrot.lane.b32.xlu0 %v1890, 126
      %v1892 = vpop.permute.xlu0 %1891
      %v1894 = vrot.slane %v1869, 3
      %1895 = vrot.lane.b32.xlu0 %v1894, 126
      %v1896 = vpop.permute.xlu0 %1895
      %1898 = vrot.lane.b32.xlu0 %v1870, 126
      %v1899 = vpop.permute.xlu0 %1898
      %v1900 = vsel %vm240, %v1868, %v1872
      %v1901 = vsel %vm242, %v1900, %v1875
      %v1902 = vsel %vm244, %v1875, %v1880
      %v1903 = vsel %vm246, %v1902, %v1884
      %v1904 = vsel %vm248, %v1903, %v1888
      %v1905 = vsel %vm250, %v1888, %v1892
      %v1906 = vsel %vm252, %v1905, %v1896
      %v1907 = vsel %vm240, %v1899, 0
      %1909 = vmatprep.subr.mxu0 0.0
      %1910 = vmatpush1.msra.mxu0 0.0
      %1911 = vmatprep.subr.mxu0 0.0
      %1912 = vmatpush1.msra.mxu0 0.0
      %1913 = vmatprep.subr.mxu0 0.0
      %1914 = vmatpush1.msra.mxu0 0.0
      %1915 = vmatprep.subr.mxu0 0.0
      %1916 = vmatpush1.msra.mxu0 0.0
      %1917 = vmatprep.subr.mxu0 0.0
      %1918 = vmatpush1.msra.mxu0 0.0
      %1919 = vmatprep.subr.mxu0 0.0
      %1920 = vmatpush1.msra.mxu0 0.0
      %1921 = vmatprep.subr.mxu0 0.0
      %1922 = vmatpush1.msra.mxu0 0.0
      %1923 = vmatprep.subr.mxu0 0.0
      %1924 = vmatpush1.msra.mxu0 0.0
      %1925 = vmatprep.subr.mxu0 0.0
      %1926 = vmatpush1.msra.mxu0 0.0
      %1927 = vmatprep.subr.mxu0 0.0
      %1928 = vmatpush1.msra.mxu0 0.0
      %1929 = vmatprep.subr.mxu0 0.0
      %1930 = vmatpush1.msra.mxu0 0.0
      %1931 = vmatprep.subr.mxu0 0.0
      %1932 = vmatpush1.msra.mxu0 0.0
      %1933 = vmatprep.subr.mxu0 0.0
      %1934 = vmatpush1.msra.mxu0 %v1907
      %1935 = vmatprep.subr.mxu0 0.0
      %1936 = vmatpush1.msra.mxu0 %v1906
      %1937 = vmatprep.subr.mxu0 0.0
      %1938 = vmatpush1.msra.mxu0 %v1904
      %1939 = vmatprep.subr.mxu0 0.0
      %1940 = vmatpush1.msra.mxu0 %v1901
      %1941 = vmatprep.subr.mxu0 0.0
      %1942 = vmatpush2.msra.mxu0 0.0
      %1943 = vmatprep.subr.mxu0 0.0
      %1944 = vmatpush2.msra.mxu0 0.0
      %1945 = vmatprep.subr.mxu0 0.0
      %1946 = vmatpush2.msra.mxu0 0.0
      %1947 = vmatprep.subr.mxu0 0.0
      %1948 = vmatpush2.msra.mxu0 0.0
      %1949 = vmatprep.subr.mxu0 0.0
      %1950 = vmatpush2.msra.mxu0 0.0
      %1951 = vmatprep.subr.mxu0 0.0
      %1952 = vmatpush2.msra.mxu0 0.0
      %1953 = vmatprep.subr.mxu0 0.0
      %1954 = vmatpush2.msra.mxu0 0.0
      %1955 = vmatprep.subr.mxu0 0.0
      %1956 = vmatpush2.msra.mxu0 0.0
      %1957 = vmatprep.subr.mxu0 0.0
      %1958 = vmatpush2.msra.mxu0 0.0
      %1959 = vmatprep.subr.mxu0 0.0
      %1960 = vmatpush2.msra.mxu0 0.0
      %1961 = vmatprep.subr.mxu0 0.0
      %1962 = vmatpush2.msra.mxu0 0.0
      %1963 = vmatprep.subr.mxu0 0.0
      %1964 = vmatpush2.msra.mxu0 0.0
      %1965 = vmatprep.subr.mxu0 0.0
      %1966 = vmatpush2.msra.mxu0 0.0
      %1967 = vmatprep.subr.mxu0 0.0
      %1968 = vmatpush2.msra.mxu0 0.0
      %1969 = vmatprep.subr.mxu0 0.0
      %1970 = vmatpush2.msra.mxu0 0.0
      %1971 = vmatprep.subr.mxu0 0.0
      %1972 = vmatpush2.msra.mxu0 0.0
      %1973 = vmatprep.mubr.f32.mxu0 0.0
      %1974 = vmatmul.mubr.f32.gmra.mxu0 %v276
      %v1975 = vpop.f32.mrf.mxu0
      %v1976 = vadd.f32 %v257, %v1975
      %v1977 = vpop.f32.mrf.mxu0
      %1978 = vmatprep.mubr.f32.mxu0 0.0
      %1979 = vmatmul.mubr.f32.gmra.mxu0 %v279
      %v1980 = vpop.f32.mrf.mxu0
      %v1981 = vadd.f32 %v262, %v1980
      %v1982 = vpop.f32.mrf.mxu0
      %1983 = vmatprep.mubr.f32.mxu0 0.0
      %1984 = vmatmul.mubr.f32.gmra.mxu0 %v282
      %v1985 = vpop.f32.mrf.mxu0
      %v1986 = vadd.f32 %v267, %v1985
      %v1987 = vpop.f32.mrf.mxu0
      %1988 = vmatprep.mubr.f32.mxu0 0.0
      %1989 = vmatmul.mubr.f32.gmra.mxu0 %v285
      %v1990 = vpop.f32.mrf.mxu0
      %v1991 = vadd.f32 %v272, %v1990
      %v1992 = vpop.f32.mrf.mxu0
      %1993 = vdwg.mxu0
      %s1994 = scalar_lea.vmem %s194, 384
      %1995 = vst.msk [vmem:[%s1994] sm:$0xff] %vm374, %v1976
      %1996 = vst.msk [vmem:[%s1994 + $0x8] sm:$0xff] %vm374, %v1981
      %1997 = vst.msk [vmem:[%s1994 + $0x10] sm:$0xff] %vm374, %v1986
      %1998 = vst.msk [vmem:[%s1994 + $0x18] sm:$0xff] %vm374, %v1991
      %s1999 = sadd.s32 %s204, 13
      %p2000 = scmp.lt.s32.totalorder %s1999, 13
      %s2001 = scalar_select %p2000, %s1999, 13
      %s2002 = scalar_lea.vmem %s184, %s2001
      %v2003 = vld [vmem:[%s2002] sm:$0x7]
      %v2004 = vld [vmem:[%s2002 + $0x10] sm:$0x7]
      %v2005 = vld [vmem:[%s2002 + $0x20] sm:$0x7]
      %v2007 = vrot.slane %v2004, 5
      %v2010 = vrot.slane %v2005, 2
      %v2013 = vrot.slane %v2003, 7
      %2014 = vrot.lane.b32.xlu0 %v2013, 127
      %v2015 = vpop.permute.xlu0 %2014
      %v2017 = vrot.slane %v2004, 4
      %2018 = vrot.lane.b32.xlu0 %v2017, 127
      %v2019 = vpop.permute.xlu0 %2018
      %v2021 = vrot.slane %v2005, 1
      %2022 = vrot.lane.b32.xlu0 %v2021, 127
      %v2023 = vpop.permute.xlu0 %2022
      %v2025 = vrot.slane %v2003, 6
      %2026 = vrot.lane.b32.xlu0 %v2025, 126
      %v2027 = vpop.permute.xlu0 %2026
      %v2029 = vrot.slane %v2004, 3
      %2030 = vrot.lane.b32.xlu0 %v2029, 126
      %v2031 = vpop.permute.xlu0 %2030
      %2033 = vrot.lane.b32.xlu0 %v2005, 126
      %v2034 = vpop.permute.xlu0 %2033
      %v2035 = vsel %vm240, %v2003, %v2007
      %v2036 = vsel %vm242, %v2035, %v2010
      %v2037 = vsel %vm244, %v2010, %v2015
      %v2038 = vsel %vm246, %v2037, %v2019
      %v2039 = vsel %vm248, %v2038, %v2023
      %v2040 = vsel %vm250, %v2023, %v2027
      %v2041 = vsel %vm252, %v2040, %v2031
      %v2042 = vsel %vm240, %v2034, 0
      %2044 = vmatprep.subr.mxu0 0.0
      %2045 = vmatpush1.msra.mxu0 0.0
      %2046 = vmatprep.subr.mxu0 0.0
      %2047 = vmatpush1.msra.mxu0 0.0
      %2048 = vmatprep.subr.mxu0 0.0
      %2049 = vmatpush1.msra.mxu0 0.0
      %2050 = vmatprep.subr.mxu0 0.0
      %2051 = vmatpush1.msra.mxu0 0.0
      %2052 = vmatprep.subr.mxu0 0.0
      %2053 = vmatpush1.msra.mxu0 0.0
      %2054 = vmatprep.subr.mxu0 0.0
      %2055 = vmatpush1.msra.mxu0 0.0
      %2056 = vmatprep.subr.mxu0 0.0
      %2057 = vmatpush1.msra.mxu0 0.0
      %2058 = vmatprep.subr.mxu0 0.0
      %2059 = vmatpush1.msra.mxu0 0.0
      %2060 = vmatprep.subr.mxu0 0.0
      %2061 = vmatpush1.msra.mxu0 0.0
      %2062 = vmatprep.subr.mxu0 0.0
      %2063 = vmatpush1.msra.mxu0 0.0
      %2064 = vmatprep.subr.mxu0 0.0
      %2065 = vmatpush1.msra.mxu0 0.0
      %2066 = vmatprep.subr.mxu0 0.0
      %2067 = vmatpush1.msra.mxu0 0.0
      %2068 = vmatprep.subr.mxu0 0.0
      %2069 = vmatpush1.msra.mxu0 %v2042
      %2070 = vmatprep.subr.mxu0 0.0
      %2071 = vmatpush1.msra.mxu0 %v2041
      %2072 = vmatprep.subr.mxu0 0.0
      %2073 = vmatpush1.msra.mxu0 %v2039
      %2074 = vmatprep.subr.mxu0 0.0
      %2075 = vmatpush1.msra.mxu0 %v2036
      %2076 = vmatprep.subr.mxu0 0.0
      %2077 = vmatpush2.msra.mxu0 0.0
      %2078 = vmatprep.subr.mxu0 0.0
      %2079 = vmatpush2.msra.mxu0 0.0
      %2080 = vmatprep.subr.mxu0 0.0
      %2081 = vmatpush2.msra.mxu0 0.0
      %2082 = vmatprep.subr.mxu0 0.0
      %2083 = vmatpush2.msra.mxu0 0.0
      %2084 = vmatprep.subr.mxu0 0.0
      %2085 = vmatpush2.msra.mxu0 0.0
      %2086 = vmatprep.subr.mxu0 0.0
      %2087 = vmatpush2.msra.mxu0 0.0
      %2088 = vmatprep.subr.mxu0 0.0
      %2089 = vmatpush2.msra.mxu0 0.0
      %2090 = vmatprep.subr.mxu0 0.0
      %2091 = vmatpush2.msra.mxu0 0.0
      %2092 = vmatprep.subr.mxu0 0.0
      %2093 = vmatpush2.msra.mxu0 0.0
      %2094 = vmatprep.subr.mxu0 0.0
      %2095 = vmatpush2.msra.mxu0 0.0
      %2096 = vmatprep.subr.mxu0 0.0
      %2097 = vmatpush2.msra.mxu0 0.0
      %2098 = vmatprep.subr.mxu0 0.0
      %2099 = vmatpush2.msra.mxu0 0.0
      %2100 = vmatprep.subr.mxu0 0.0
      %2101 = vmatpush2.msra.mxu0 0.0
      %2102 = vmatprep.subr.mxu0 0.0
      %2103 = vmatpush2.msra.mxu0 0.0
      %2104 = vmatprep.subr.mxu0 0.0
      %2105 = vmatpush2.msra.mxu0 0.0
      %2106 = vmatprep.subr.mxu0 0.0
      %2107 = vmatpush2.msra.mxu0 0.0
      %2108 = vmatprep.mubr.f32.mxu0 0.0
      %2109 = vmatmul.mubr.f32.gmra.mxu0 %v276
      %v2110 = vpop.f32.mrf.mxu0
      %v2111 = vadd.f32 %v257, %v2110
      %v2112 = vpop.f32.mrf.mxu0
      %2113 = vmatprep.mubr.f32.mxu0 0.0
      %2114 = vmatmul.mubr.f32.gmra.mxu0 %v279
      %v2115 = vpop.f32.mrf.mxu0
      %v2116 = vadd.f32 %v262, %v2115
      %v2117 = vpop.f32.mrf.mxu0
      %2118 = vmatprep.mubr.f32.mxu0 0.0
      %2119 = vmatmul.mubr.f32.gmra.mxu0 %v282
      %v2120 = vpop.f32.mrf.mxu0
      %v2121 = vadd.f32 %v267, %v2120
      %v2122 = vpop.f32.mrf.mxu0
      %2123 = vmatprep.mubr.f32.mxu0 0.0
      %2124 = vmatmul.mubr.f32.gmra.mxu0 %v285
      %v2125 = vpop.f32.mrf.mxu0
      %v2126 = vadd.f32 %v272, %v2125
      %v2127 = vpop.f32.mrf.mxu0
      %2128 = vdwg.mxu0
      %s2129 = scalar_lea.vmem %s194, 416
      %2130 = vst.msk [vmem:[%s2129] sm:$0xff] %vm374, %v2111
      %2131 = vst.msk [vmem:[%s2129 + $0x8] sm:$0xff] %vm374, %v2116
      %2132 = vst.msk [vmem:[%s2129 + $0x10] sm:$0xff] %vm374, %v2121
      %2133 = vst.msk [vmem:[%s2129 + $0x18] sm:$0xff] %vm374, %v2126
      %s2134 = smul.u32 14, %s19
      %p2135 = scmp.lt.s32.totalorder %s18, 1
      %s2136 = scalar_select %p2135, %s18, 1
      %p2137 = scmp.lt.s32.totalorder %s2134, 13
      %s2138 = scalar_select %p2137, %s2134, 13
      %s2139 = smul.addr %s2138, 4
      %s2140 = smul.addr %s2136, 56
      %s2141 = sadd.s32 %s2139, %s2140
      %s2142 = smul.addr %s2141, 8
      %s2143 = scalar_lea.vmem %s3, %s2142
      // Predicated region
      $region33: #{fool_conv_module.1} parent=31 // pred_check
        %p2144 = pneg %p114
      $region34: #{fool_conv_module.1} parent=31 // pred_check_branch
        %2146 = sbr.rel (%p2144) target = $region36
      $region35: #{fool_conv_module.1} parent=31 // pred_region
        %s2147 = smul.u32 14, %s19
      $region36: #{fool_conv_module.1} parent=31 // pred_fallthru
        _
    $region32: #{fool_conv_module.1} parent=5 // pred_fallthru
      _
    %p2148 = scmp.le.s32.totalorder 2, %s9
    // Predicated region
    $region37: #{fool_conv_module.1} parent=5 // pred_check
      %p2149 = pneg %p2148
    $region38: #{fool_conv_module.1} parent=5 // pred_check_branch
      %2151 = sbr.rel (%p2149) target = $region40
    $region39: #{fool_conv_module.1} parent=5 // pred_region
      %s2152 = ssub.s32 %s9, 2
      // Predicated region
      $region41: #{fool_conv_module.1} parent=39 // pred_check
        %p2153 = pneg %p120
      $region42: #{fool_conv_module.1} parent=39 // pred_check_branch
        %2155 = sbr.rel (%p2153) target = $region44
      $region43: #{fool_conv_module.1} parent=39 // pred_region
        %s2156 = smul.u32 14, %s21
        %p2157 = scmp.lt.s32.totalorder %s20, 1
        %s2158 = scalar_select %p2157, %s20, 1
        %p2159 = scmp.lt.s32.totalorder %s2156, 13
        %s2160 = scalar_select %p2159, %s2156, 13
        %s2161 = smul.addr %s2160, 4
        %s2162 = smul.addr %s2158, 56
        %s2163 = sadd.s32 %s2161, %s2162
        %s2164 = smul.addr %s2163, 8
        %s2165 = scalar_lea.vmem %s3, %s2164
      $region44: #{fool_conv_module.1} parent=39 // pred_fallthru
        _
    $region40: #{fool_conv_module.1} parent=5 // pred_fallthru
      _
  $region6: #{fool_conv_module.1} parent=0 // loop_footer
    %s13 = sadd.s32 1, %s9
  $region7: #{fool_conv_module.1} parent=0 // loop_footer_branch
    %8 = sbr.rel target = $region3
  $region8: #{fool_conv_module.1} parent=0 // loop_exit
    _

</llo_original>
